<compile_context>
chip_gen: v7x
topology: tpu7x:2x2x1
jax: 0.10.0
libtpu: 0.0.40
codegen_flags: <defaults>
</compile_context>

<pallas_src>
import functools
import math

import jax
import jax.numpy as jnp
from jax.experimental import pallas as pl
from jax.experimental.pallas import tpu as pltpu


# ----------------------------------------------------------------------------
# Fused forward kernel: embeddings-LN + encoder layer `l` + (on last layer) head
# ----------------------------------------------------------------------------

def _bert_forward_kernel(
    word_ref, type_ref, pos_ref, embln_ref, mask_ref,
    wqkv_ref, bqkv_ref, wo_ref, c1_ref, wi_ref, bi_ref, wo2_ref, c2_ref,
    poolw_ref, poolb_ref, fcw_ref, fcb_ref,
    probs_ref,
    h_ref,
    *, num_heads, head_dim, hidden, eps, num_layers):
    l = pl.program_id(1)          # layer index (grid axis 1, "arbitrary")
    bf16 = jnp.bfloat16
    H = hidden

    def layer_norm(x, gamma, beta):
        mean = jnp.mean(x, axis=-1, keepdims=True)
        xc = x - mean
        var = jnp.mean(xc * xc, axis=-1, keepdims=True)
        return xc * jax.lax.rsqrt(var + eps) * gamma + beta

    # ---- layer 0: (word + pos + type) embedding add fused with LayerNorm -> VMEM h ----
    @pl.when(l == 0)
    def _():
        emb = (word_ref[0].astype(jnp.float32)
               + pos_ref[0].astype(jnp.float32)
               + type_ref[0].astype(jnp.float32))                      # [S, H] f32
        h_ref[...] = layer_norm(emb, embln_ref[0:1, :], embln_ref[1:2, :])

    # ---- encoder layer `l` (weights for this layer streamed via BlockSpec) ----
    h = h_ref[...]                                                      # [S, H] f32 residual
    x = h.astype(bf16)

    # fused QKV projection: one [H, 3H] MXU matmul
    qkv = jnp.dot(x, wqkv_ref[0], preferred_element_type=jnp.float32) + bqkv_ref[0]
    qkv = qkv.astype(bf16)                                              # [S, 3H]
    mask = mask_ref[0]                                                  # [1, S] additive mask
    scale = 1.0 / math.sqrt(head_dim)

    # attention + out-projection + residual; heads statically unrolled, merge-heads folded
    # into the out-proj accumulation (no lane-axis concatenate).
    # TODO(synk): switch to a head-batched dot_general once QKV is produced head-major.
    c1 = c1_ref[0]                                                      # [3, H] = [bo; ln1_g; ln1_b]
    y = h + c1[0:1, :]
    for hd in range(num_heads):
        lo = hd * head_dim
        qh = qkv[:, lo:lo + head_dim]
        kh = qkv[:, H + lo:H + lo + head_dim]
        vh = qkv[:, 2 * H + lo:2 * H + lo + head_dim]
        s = jax.lax.dot_general(qh, kh, (((1,), (1,)), ((), ())),
                                preferred_element_type=jnp.float32) * scale     # [S, S]
        s = s + mask
        mx = jnp.max(s, axis=-1, keepdims=True)
        e = jnp.exp(s - mx)
        p = e * pl.reciprocal(jnp.sum(e, axis=-1, keepdims=True), approx=True)
        ctx = jnp.dot(p.astype(bf16), vh, preferred_element_type=jnp.float32)   # [S, dH]
        y = y + jnp.dot(ctx.astype(bf16), wo_ref[0, lo:lo + head_dim, :],
                        preferred_element_type=jnp.float32)
    h1 = layer_norm(y, c1[1:2, :], c1[2:3, :])

    # FFN: intermediate (GELU) then output, fused with residual + LayerNorm
    inter = jnp.dot(h1.astype(bf16), wi_ref[0], preferred_element_type=jnp.float32)
    inter = inter + bi_ref[0]
    # tanh-approx GELU. TODO(synk): switch to erf-GELU for bit-parity with HF BERT.
    gc = math.sqrt(2.0 / math.pi)
    inter = 0.5 * inter * (1.0 + jnp.tanh(gc * (inter + 0.044715 * inter * inter * inter)))
    c2 = c2_ref[0]                                                      # [3, H] = [bo2; ln2_g; ln2_b]
    y2 = jnp.dot(inter.astype(bf16), wo2_ref[0], preferred_element_type=jnp.float32)
    y2 = y2 + c2[0:1, :] + h1
    h2 = layer_norm(y2, c2[1:2, :], c2[2:3, :])
    h_ref[...] = h2

    # ---- last layer: pooler(tanh) + dropout(eval)=identity + classifier + softmax ----
    @pl.when(l == num_layers - 1)
    def _():
        pooled = jnp.dot(h2.astype(bf16), poolw_ref[...],
                         preferred_element_type=jnp.float32) + poolb_ref[...]
        pooled = jnp.tanh(pooled)                                       # [S, H] (only CLS row used)
        logits = jnp.dot(pooled.astype(bf16), fcw_ref[...],
                         preferred_element_type=jnp.float32) + fcb_ref[...]     # [S, 128] lane-dense
        row = logits[0:1, :]                                            # CLS-token logits
        mx = jnp.max(row, axis=-1, keepdims=True)
        e = jnp.exp(row - mx)                                           # padded lanes: exp(-1e9-mx)==0
        probs_ref[0] = e / jnp.sum(e, axis=-1, keepdims=True)


# ----------------------------------------------------------------------------
# Wrapper: one pallas_call for the whole forward
# ----------------------------------------------------------------------------

def bert_classifier_forward(params, input_ids, attention_mask, token_type_ids, cfg):
    B, S = input_ids.shape
    H, nH, L = cfg["hidden"], cfg["num_heads"], cfg["num_layers"]
    I = cfg["intermediate"]
    C = cfg["num_labels"]
    CP = params["fc_w_pad"].shape[1]          # lane-padded (128) classifier width
    dH = H // nH

    # --- plain-JAX glue: embedding gathers + HF-style additive attention mask ---
    word = jnp.take(params["word_emb"], input_ids, axis=0)              # [B, S, H] f32
    typ = jnp.take(params["type_emb"], token_type_ids, axis=0)          # [B, S, H] f32
    pos = params["pos_emb"][:S][None, :, :]                             # [1, S, H] f32
    add_mask = ((1.0 - attention_mask.astype(jnp.float32)) * -10000.0).reshape(B, 1, S)

    kern = functools.partial(_bert_forward_kernel, num_heads=nH, head_dim=dH,
                             hidden=H, eps=1e-12, num_layers=L)

    batch_idx = lambda b, l: (b, 0, 0)        # per-batch activations / mask / output
    layer_idx = lambda b, l: (l, 0, 0)        # stacked per-layer weights
    const3d = lambda b, l: (0, 0, 0)
    const2d = lambda b, l: (0, 0)

    probs_pad = pl.pallas_call(
        kern,
        out_shape=jax.ShapeDtypeStruct((B, 1, CP), jnp.float32),
        grid=(B, L),
        in_specs=[
            pl.BlockSpec((1, S, H), batch_idx),         # gathered word embeddings
            pl.BlockSpec((1, S, H), batch_idx),         # gathered token-type embeddings
            pl.BlockSpec((1, S, H), const3d),           # position embeddings
            pl.BlockSpec((2, H), const2d),              # [emb_ln_gamma; emb_ln_beta]
            pl.BlockSpec((1, 1, S), batch_idx),         # additive attention mask
            pl.BlockSpec((1, H, 3 * H), layer_idx),     # fused QKV weight   [L,H,3H] bf16
            pl.BlockSpec((1, 1, 3 * H), layer_idx),     # fused QKV bias     [L,1,3H] f32
            pl.BlockSpec((1, H, H), layer_idx),         # attn out-proj W    [L,H,H]  bf16
            pl.BlockSpec((1, 3, H), layer_idx),         # [bo; ln1_g; ln1_b] [L,3,H]  f32
            pl.BlockSpec((1, H, I), layer_idx),         # FFN-in W           [L,H,I]  bf16
            pl.BlockSpec((1, 1, I), layer_idx),         # FFN-in bias        [L,1,I]  f32
            pl.BlockSpec((1, I, H), layer_idx),         # FFN-out W          [L,I,H]  bf16
            pl.BlockSpec((1, 3, H), layer_idx),         # [bo2; ln2_g; ln2_b][L,3,H]  f32
            pl.BlockSpec((H, H), const2d),              # pooler weight
            pl.BlockSpec((1, H), const2d),              # pooler bias
            pl.BlockSpec((H, CP), const2d),             # classifier weight (lane-padded)
            pl.BlockSpec((1, CP), const2d),             # classifier bias   (lane-padded)
        ],
        out_specs=pl.BlockSpec((1, 1, CP), batch_idx),
        scratch_shapes=[pltpu.VMEM((S, H), jnp.float32)],   # resident residual stream
        compiler_params=pltpu.CompilerParams(
            dimension_semantics=("parallel", "arbitrary")),
    )(word, typ, pos, params["emb_ln"], add_mask,
      params["wqkv"], params["bqkv"], params["wo"], params["c1"],
      params["wi"], params["bi"], params["wo2"], params["c2"],
      params["pool_w"], params["pool_b"], params["fc_w_pad"], params["fc_b_pad"])

    return probs_pad[:, 0, :C]                # [B, num_labels]


# ----------------------------------------------------------------------------
# Parameter init (deterministic, synthetic bert-style config at small scale)
# ----------------------------------------------------------------------------

def init_params(key, cfg):
    H, I, L = cfg["hidden"], cfg["intermediate"], cfg["num_layers"]
    V, P, T, C = cfg["vocab"], cfg["max_pos"], cfg["type_vocab"], cfg["num_labels"]
    std = 0.02

    def nrm(k, shape):
        return std * jax.random.normal(k, shape, dtype=jnp.float32)

    keys = iter(jax.random.split(key, 8 + 8 * L))
    p = {
        "word_emb": nrm(next(keys), (V, H)),
        "pos_emb": nrm(next(keys), (P, H)),
        "type_emb": nrm(next(keys), (T, H)),
        "emb_ln_g": jnp.ones((H,), jnp.float32),
        "emb_ln_b": jnp.zeros((H,), jnp.float32),
        "pool_w": nrm(next(keys), (H, H)),
        "pool_b": jnp.zeros((H,), jnp.float32),
        "fc_w": nrm(next(keys), (H, C)),
        "fc_b": jnp.zeros((C,), jnp.float32),
        "layers": [],
    }
    for _ in range(L):
        p["layers"].append({
            "wq": nrm(next(keys), (H, H)), "bq": jnp.zeros((H,), jnp.float32),
            "wk": nrm(next(keys), (H, H)), "bk": jnp.zeros((H,), jnp.float32),
            "wv": nrm(next(keys), (H, H)), "bv": jnp.zeros((H,), jnp.float32),
            "wo": nrm(next(keys), (H, H)), "bo": jnp.zeros((H,), jnp.float32),
            "ln1_g": jnp.ones((H,), jnp.float32), "ln1_b": jnp.zeros((H,), jnp.float32),
            "wi": nrm(next(keys), (H, I)), "bi": jnp.zeros((I,), jnp.float32),
            "wo2": nrm(next(keys), (I, H)), "bo2": jnp.zeros((H,), jnp.float32),
            "ln2_g": jnp.ones((H,), jnp.float32), "ln2_b": jnp.zeros((H,), jnp.float32),
        })
    return p


def prepare_params(params, lane_pad=128):
    """Stack per-layer weights into [L, ...] tensors (layer-streamed via BlockSpecs),
    fuse Q/K/V into [H, 3H], pack bias/gamma/beta triples, pad the classifier to a
    lane-dense 128-wide slab, and cast matmul weights to bf16 (biases / LN in f32)."""
    bf = jnp.bfloat16
    layers = params["layers"]
    H = params["pool_w"].shape[0]
    C = params["fc_w"].shape[1]
    CP = max(lane_pad, C)
    return {
        "word_emb": params["word_emb"],
        "pos_emb": params["pos_emb"],
        "type_emb": params["type_emb"],
        "emb_ln": jnp.stack([params["emb_ln_g"], params["emb_ln_b"]], axis=0),        # [2, H]
        "wqkv": jnp.stack([jnp.concatenate([l["wq"], l["wk"], l["wv"]], axis=1)
                           for l in layers]).astype(bf),                              # [L, H, 3H]
        "bqkv": jnp.stack([jnp.concatenate([l["bq"], l["bk"], l["bv"]], axis=0)
                           for l in layers])[:, None, :],                             # [L, 1, 3H]
        "wo": jnp.stack([l["wo"] for l in layers]).astype(bf),                        # [L, H, H]
        "c1": jnp.stack([jnp.stack([l["bo"], l["ln1_g"], l["ln1_b"]])
                         for l in layers]),                                           # [L, 3, H]
        "wi": jnp.stack([l["wi"] for l in layers]).astype(bf),                        # [L, H, I]
        "bi": jnp.stack([l["bi"] for l in layers])[:, None, :],                       # [L, 1, I]
        "wo2": jnp.stack([l["wo2"] for l in layers]).astype(bf),                      # [L, I, H]
        "c2": jnp.stack([jnp.stack([l["bo2"], l["ln2_g"], l["ln2_b"]])
                         for l in layers]),                                           # [L, 3, H]
        "pool_w": params["pool_w"].astype(bf),                                        # [H, H]
        "pool_b": params["pool_b"].reshape(1, H),                                     # [1, H]
        "fc_w_pad": jnp.zeros((H, CP), jnp.float32).at[:, :C]
                      .set(params["fc_w"]).astype(bf),                                # [H, 128]
        "fc_b_pad": jnp.full((1, CP), -1e9, jnp.float32).at[0, :C]
                      .set(params["fc_b"]),                                           # [1, 128]
    }


# ----------------------------------------------------------------------------
# Main
# ----------------------------------------------------------------------------

if __name__ == "__main__":
    cfg = dict(
        vocab=64, hidden=128, num_layers=2, num_heads=2,
        intermediate=256, max_pos=16, type_vocab=2, num_labels=4,
    )
    B, S = 2, 8

    key = jax.random.PRNGKey(0)
    kp, kid, ktt = jax.random.split(key, 3)

    params = prepare_params(init_params(kp, cfg))

    input_ids = jax.random.randint(kid, (B, S), 0, cfg["vocab"], dtype=jnp.int32)
    token_type_ids = jax.random.randint(ktt, (B, S), 0, cfg["type_vocab"], dtype=jnp.int32)
    # second sequence has its last 3 tokens padded out
    attention_mask = jnp.array(
        [[1, 1, 1, 1, 1, 1, 1, 1],
         [1, 1, 1, 1, 1, 0, 0, 0]], dtype=jnp.int32)

    forward = jax.jit(functools.partial(bert_classifier_forward, cfg=cfg))
    probs = forward(params, input_ids, attention_mask, token_type_ids)
    probs = jax.block_until_ready(probs)

    assert probs.shape == (B, cfg["num_labels"])
    assert bool(jnp.all(jnp.isfinite(probs)))
    assert bool(jnp.allclose(jnp.sum(probs, axis=1), 1.0, atol=1e-5))
    print("KERNEL_OK")
</pallas_src>

<mosaic_0001>
module attributes {stable_mosaic.version = 11 : i64} {
  func.func @_bert_forward_kernel(%arg0: i32, %arg1: i32, %arg2: memref<1x8x128xf32, #tpu.memory_space<vmem>>, %arg3: memref<1x8x128xf32, #tpu.memory_space<vmem>>, %arg4: memref<1x8x128xf32, #tpu.memory_space<vmem>>, %arg5: memref<2x128xf32, #tpu.memory_space<vmem>>, %arg6: memref<1x1x8xf32, #tpu.memory_space<vmem>>, %arg7: memref<1x128x384xbf16, #tpu.memory_space<vmem>>, %arg8: memref<1x1x384xf32, #tpu.memory_space<vmem>>, %arg9: memref<1x128x128xbf16, #tpu.memory_space<vmem>>, %arg10: memref<1x3x128xf32, #tpu.memory_space<vmem>>, %arg11: memref<1x128x256xbf16, #tpu.memory_space<vmem>>, %arg12: memref<1x1x256xf32, #tpu.memory_space<vmem>>, %arg13: memref<1x256x128xbf16, #tpu.memory_space<vmem>>, %arg14: memref<1x3x128xf32, #tpu.memory_space<vmem>>, %arg15: memref<128x128xbf16, #tpu.memory_space<vmem>>, %arg16: memref<1x128xf32, #tpu.memory_space<vmem>>, %arg17: memref<128x128xbf16, #tpu.memory_space<vmem>>, %arg18: memref<1x128xf32, #tpu.memory_space<vmem>>, %arg19: memref<1x1x128xf32, #tpu.memory_space<vmem>>, %arg20: memref<8x128xf32, #tpu.memory_space<vmem>>) attributes {dimension_semantics = [#tpu.dimension_semantics<parallel>, #tpu.dimension_semantics<arbitrary>], iteration_bounds = array<i64: 2, 2>, scalar_prefetch = 0 : i64, scratch_operands = 1 : i64, tpu.core_type = #tpu.core_type<tc>, window_params = [{transform_indices = @transform_0, window_bounds = array<i64: 1, 8, 128>}, {transform_indices = @transform_1, window_bounds = array<i64: 1, 8, 128>}, {pipeline_mode = #tpu.pipeline_mode<synchronous>, transform_indices = @transform_2, window_bounds = array<i64: 1, 8, 128>}, {pipeline_mode = #tpu.pipeline_mode<synchronous>, transform_indices = @transform_3, window_bounds = array<i64: 2, 128>}, {transform_indices = @transform_4, window_bounds = array<i64: 1, 1, 8>}, {transform_indices = @transform_5, window_bounds = array<i64: 1, 128, 384>}, {transform_indices = @transform_6, window_bounds = array<i64: 1, 1, 384>}, {transform_indices = @transform_7, window_bounds = array<i64: 1, 128, 128>}, {transform_indices = @transform_8, window_bounds = array<i64: 1, 3, 128>}, {transform_indices = @transform_9, window_bounds = array<i64: 1, 128, 256>}, {transform_indices = @transform_10, window_bounds = array<i64: 1, 1, 256>}, {transform_indices = @transform_11, window_bounds = array<i64: 1, 256, 128>}, {transform_indices = @transform_12, window_bounds = array<i64: 1, 3, 128>}, {pipeline_mode = #tpu.pipeline_mode<synchronous>, transform_indices = @transform_13, window_bounds = array<i64: 128, 128>}, {pipeline_mode = #tpu.pipeline_mode<synchronous>, transform_indices = @transform_14, window_bounds = array<i64: 1, 128>}, {pipeline_mode = #tpu.pipeline_mode<synchronous>, transform_indices = @transform_15, window_bounds = array<i64: 128, 128>}, {pipeline_mode = #tpu.pipeline_mode<synchronous>, transform_indices = @transform_16, window_bounds = array<i64: 1, 128>}, {transform_indices = @transform_17, window_bounds = array<i64: 1, 1, 128>}]} {
    %c0_i32 = arith.constant 0 : i32
    %0 = arith.cmpi eq, %arg1, %c0_i32 : i32
    %1 = arith.extui %0 : i1 to i32
    %c0_i32_0 = arith.constant 0 : i32
    %2 = arith.cmpi ne, %1, %c0_i32_0 : i32
    scf.if %2 {
      %c0_62 = arith.constant 0 : index
      %c0_63 = arith.constant 0 : index
      %c0_64 = arith.constant 0 : index
      %149 = vector.load %arg2[%c0_62, %c0_63, %c0_64] : memref<1x8x128xf32, #tpu.memory_space<vmem>>, vector<1x8x128xf32>
      %150 = vector.shape_cast %149 : vector<1x8x128xf32> to vector<8x128xf32>
      %c0_65 = arith.constant 0 : index
      %c0_66 = arith.constant 0 : index
      %c0_67 = arith.constant 0 : index
      %151 = vector.load %arg4[%c0_65, %c0_66, %c0_67] : memref<1x8x128xf32, #tpu.memory_space<vmem>>, vector<1x8x128xf32>
      %152 = vector.shape_cast %151 : vector<1x8x128xf32> to vector<8x128xf32>
      %153 = arith.addf %150, %152 : vector<8x128xf32>
      %c0_68 = arith.constant 0 : index
      %c0_69 = arith.constant 0 : index
      %c0_70 = arith.constant 0 : index
      %154 = vector.load %arg3[%c0_68, %c0_69, %c0_70] : memref<1x8x128xf32, #tpu.memory_space<vmem>>, vector<1x8x128xf32>
      %155 = vector.shape_cast %154 : vector<1x8x128xf32> to vector<8x128xf32>
      %156 = arith.addf %153, %155 : vector<8x128xf32>
      %c0_71 = arith.constant 0 : index
      %c0_72 = arith.constant 0 : index
      %157 = vector.load %arg5[%c0_71, %c0_72] : memref<2x128xf32, #tpu.memory_space<vmem>>, vector<1x128xf32>
      %c1 = arith.constant 1 : index
      %c0_73 = arith.constant 0 : index
      %158 = vector.load %arg5[%c1, %c0_73] : memref<2x128xf32, #tpu.memory_space<vmem>>, vector<1x128xf32>
      %cst_74 = arith.constant dense<0.000000e+00> : vector<8xf32>
      %159 = vector.multi_reduction <add>, %156, %cst_74 [1] : vector<8x128xf32> to vector<8xf32>
      %160 = vector.shape_cast %159 : vector<8xf32> to vector<8x1xf32>
      %cst_75 = arith.constant 1.280000e+02 : f32
      %161 = vector.broadcast %cst_75 : f32 to vector<8x1xf32>
      %162 = arith.divf %160, %161 : vector<8x1xf32>
      %163 = vector.broadcast %162 : vector<8x1xf32> to vector<8x128xf32>
      %164 = arith.subf %156, %163 : vector<8x128xf32>
      %165 = arith.mulf %164, %164 : vector<8x128xf32>
      %cst_76 = arith.constant dense<0.000000e+00> : vector<8xf32>
      %166 = vector.multi_reduction <add>, %165, %cst_76 [1] : vector<8x128xf32> to vector<8xf32>
      %167 = vector.shape_cast %166 : vector<8xf32> to vector<8x1xf32>
      %cst_77 = arith.constant 1.280000e+02 : f32
      %168 = vector.broadcast %cst_77 : f32 to vector<8x1xf32>
      %169 = arith.divf %167, %168 : vector<8x1xf32>
      %cst_78 = arith.constant 9.99999996E-13 : f32
      %170 = vector.broadcast %cst_78 : f32 to vector<8x1xf32>
      %171 = arith.addf %169, %170 : vector<8x1xf32>
      %172 = math.rsqrt %171 : vector<8x1xf32>
      %173 = vector.broadcast %172 : vector<8x1xf32> to vector<8x128xf32>
      %174 = arith.mulf %164, %173 : vector<8x128xf32>
      %175 = vector.broadcast %157 : vector<1x128xf32> to vector<8x128xf32>
      %176 = arith.mulf %174, %175 : vector<8x128xf32>
      %177 = vector.broadcast %158 : vector<1x128xf32> to vector<8x128xf32>
      %178 = arith.addf %176, %177 : vector<8x128xf32>
      %c0_79 = arith.constant 0 : index
      %c0_80 = arith.constant 0 : index
      %179 = vector.load %arg20[%c0_79, %c0_80] : memref<8x128xf32, #tpu.memory_space<vmem>>, vector<8x128xf32>
      tpu.vector_store %arg20[%c0_79, %c0_80], %178 {strides = array<i32>} : memref<8x128xf32, #tpu.memory_space<vmem>>, vector<8x128xf32>,
    } else {
    }
    %c0 = arith.constant 0 : index
    %c0_1 = arith.constant 0 : index
    %3 = vector.load %arg20[%c0, %c0_1] : memref<8x128xf32, #tpu.memory_space<vmem>>, vector<8x128xf32>
    %4 = arith.truncf %3 : vector<8x128xf32> to vector<8x128xbf16>
    %c0_2 = arith.constant 0 : index
    %c0_3 = arith.constant 0 : index
    %c0_4 = arith.constant 0 : index
    %5 = vector.load %arg7[%c0_2, %c0_3, %c0_4] : memref<1x128x384xbf16, #tpu.memory_space<vmem>>, vector<1x128x384xbf16>
    %6 = vector.shape_cast %5 : vector<1x128x384xbf16> to vector<128x384xbf16>
    %cst = arith.constant dense<0.000000e+00> : vector<8x384xf32>
    %7 = tpu.matmul %4, %6, %cst {dimension_numbers = #tpu.dot_dimension_numbers<[1], [0], [0], [1], [0, 0, 1, 1], [], []>} : vector<8x128xbf16>, vector<128x384xbf16>, vector<8x384xf32> -> vector<8x384xf32>
    %c0_5 = arith.constant 0 : index
    %c0_6 = arith.constant 0 : index
    %c0_7 = arith.constant 0 : index
    %8 = vector.load %arg8[%c0_5, %c0_6, %c0_7] : memref<1x1x384xf32, #tpu.memory_space<vmem>>, vector<1x1x384xf32>
    %9 = vector.shape_cast %8 : vector<1x1x384xf32> to vector<1x384xf32>
    %10 = vector.broadcast %9 : vector<1x384xf32> to vector<8x384xf32>
    %11 = arith.addf %7, %10 : vector<8x384xf32>
    %12 = arith.truncf %11 : vector<8x384xf32> to vector<8x384xbf16>
    %c0_8 = arith.constant 0 : index
    %c0_9 = arith.constant 0 : index
    %c0_10 = arith.constant 0 : index
    %13 = vector.load %arg6[%c0_8, %c0_9, %c0_10] : memref<1x1x8xf32, #tpu.memory_space<vmem>>, vector<1x1x8xf32>
    %14 = vector.shape_cast %13 : vector<1x1x8xf32> to vector<1x8xf32>
    %c0_11 = arith.constant 0 : index
    %c0_12 = arith.constant 0 : index
    %c0_13 = arith.constant 0 : index
    %15 = vector.load %arg10[%c0_11, %c0_12, %c0_13] : memref<1x3x128xf32, #tpu.memory_space<vmem>>, vector<1x3x128xf32>
    %16 = vector.shape_cast %15 : vector<1x3x128xf32> to vector<3x128xf32>
    %17 = vector.extract_strided_slice %16 {offsets = [0, 0], sizes = [1, 128], strides = [1, 1]} : vector<3x128xf32> to vector<1x128xf32>
    %18 = vector.broadcast %17 : vector<1x128xf32> to vector<8x128xf32>
    %19 = arith.addf %3, %18 : vector<8x128xf32>
    %20 = vector.extract_strided_slice %12 {offsets = [0, 0], sizes = [8, 64], strides = [1, 1]} : vector<8x384xbf16> to vector<8x64xbf16>
    %21 = vector.extract_strided_slice %12 {offsets = [0, 128], sizes = [8, 64], strides = [1, 1]} : vector<8x384xbf16> to vector<8x64xbf16>
    %22 = vector.extract_strided_slice %12 {offsets = [0, 256], sizes = [8, 64], strides = [1, 1]} : vector<8x384xbf16> to vector<8x64xbf16>
    %cst_14 = arith.constant dense<0.000000e+00> : vector<8x8xf32>
    %23 = tpu.matmul %20, %21, %cst_14 {dimension_numbers = #tpu.dot_dimension_numbers<[1], [1], [0], [0], [0, 0, 1, 0], [], []>} : vector<8x64xbf16>, vector<8x64xbf16>, vector<8x8xf32> -> vector<8x8xf32>
    %cst_15 = arith.constant 1.250000e-01 : f32
    %24 = vector.broadcast %cst_15 : f32 to vector<8x8xf32>
    %25 = arith.mulf %23, %24 : vector<8x8xf32>
    %26 = vector.broadcast %14 : vector<1x8xf32> to vector<8x8xf32>
    %27 = arith.addf %25, %26 : vector<8x8xf32>
    %cst_16 = arith.constant dense<0xFF800000> : vector<8xf32>
    %28 = vector.multi_reduction <maximumf>, %27, %cst_16 [1] : vector<8x8xf32> to vector<8xf32>
    %29 = vector.shape_cast %28 : vector<8xf32> to vector<8x1xf32>
    %30 = vector.broadcast %29 : vector<8x1xf32> to vector<8x8xf32>
    %31 = arith.subf %27, %30 : vector<8x8xf32>
    %32 = math.exp %31 : vector<8x8xf32>
    %cst_17 = arith.constant dense<0.000000e+00> : vector<8xf32>
    %33 = vector.multi_reduction <add>, %32, %cst_17 [1] : vector<8x8xf32> to vector<8xf32>
    %34 = vector.shape_cast %33 : vector<8xf32> to vector<8x1xf32>
    %35 = tpu.reciprocal %34 {approx = true} : vector<8x1xf32> -> vector<8x1xf32>
    %36 = vector.broadcast %35 : vector<8x1xf32> to vector<8x8xf32>
    %37 = arith.mulf %32, %36 : vector<8x8xf32>
    %38 = arith.truncf %37 : vector<8x8xf32> to vector<8x8xbf16>
    %cst_18 = arith.constant dense<0.000000e+00> : vector<8x64xf32>
    %39 = tpu.matmul %38, %22, %cst_18 {dimension_numbers = #tpu.dot_dimension_numbers<[1], [0], [0], [1], [0, 0, 1, 1], [], []>} : vector<8x8xbf16>, vector<8x64xbf16>, vector<8x64xf32> -> vector<8x64xf32>
    %40 = arith.truncf %39 : vector<8x64xf32> to vector<8x64xbf16>
    %c0_19 = arith.constant 0 : index
    %c0_20 = arith.constant 0 : index
    %c0_21 = arith.constant 0 : index
    %41 = vector.load %arg9[%c0_19, %c0_20, %c0_21] : memref<1x128x128xbf16, #tpu.memory_space<vmem>>, vector<1x64x128xbf16>
    %42 = vector.shape_cast %41 : vector<1x64x128xbf16> to vector<64x128xbf16>
    %cst_22 = arith.constant dense<0.000000e+00> : vector<8x128xf32>
    %43 = tpu.matmul %40, %42, %cst_22 {dimension_numbers = #tpu.dot_dimension_numbers<[1], [0], [0], [1], [0, 0, 1, 1], [], []>} : vector<8x64xbf16>, vector<64x128xbf16>, vector<8x128xf32> -> vector<8x128xf32>
    %44 = arith.addf %19, %43 : vector<8x128xf32>
    %45 = vector.extract_strided_slice %12 {offsets = [0, 64], sizes = [8, 64], strides = [1, 1]} : vector<8x384xbf16> to vector<8x64xbf16>
    %46 = vector.extract_strided_slice %12 {offsets = [0, 192], sizes = [8, 64], strides = [1, 1]} : vector<8x384xbf16> to vector<8x64xbf16>
    %47 = vector.extract_strided_slice %12 {offsets = [0, 320], sizes = [8, 64], strides = [1, 1]} : vector<8x384xbf16> to vector<8x64xbf16>
    %cst_23 = arith.constant dense<0.000000e+00> : vector<8x8xf32>
    %48 = tpu.matmul %45, %46, %cst_23 {dimension_numbers = #tpu.dot_dimension_numbers<[1], [1], [0], [0], [0, 0, 1, 0], [], []>} : vector<8x64xbf16>, vector<8x64xbf16>, vector<8x8xf32> -> vector<8x8xf32>
    %cst_24 = arith.constant 1.250000e-01 : f32
    %49 = vector.broadcast %cst_24 : f32 to vector<8x8xf32>
    %50 = arith.mulf %48, %49 : vector<8x8xf32>
    %51 = vector.broadcast %14 : vector<1x8xf32> to vector<8x8xf32>
    %52 = arith.addf %50, %51 : vector<8x8xf32>
    %cst_25 = arith.constant dense<0xFF800000> : vector<8xf32>
    %53 = vector.multi_reduction <maximumf>, %52, %cst_25 [1] : vector<8x8xf32> to vector<8xf32>
    %54 = vector.shape_cast %53 : vector<8xf32> to vector<8x1xf32>
    %55 = vector.broadcast %54 : vector<8x1xf32> to vector<8x8xf32>
    %56 = arith.subf %52, %55 : vector<8x8xf32>
    %57 = math.exp %56 : vector<8x8xf32>
    %cst_26 = arith.constant dense<0.000000e+00> : vector<8xf32>
    %58 = vector.multi_reduction <add>, %57, %cst_26 [1] : vector<8x8xf32> to vector<8xf32>
    %59 = vector.shape_cast %58 : vector<8xf32> to vector<8x1xf32>
    %60 = tpu.reciprocal %59 {approx = true} : vector<8x1xf32> -> vector<8x1xf32>
    %61 = vector.broadcast %60 : vector<8x1xf32> to vector<8x8xf32>
    %62 = arith.mulf %57, %61 : vector<8x8xf32>
    %63 = arith.truncf %62 : vector<8x8xf32> to vector<8x8xbf16>
    %cst_27 = arith.constant dense<0.000000e+00> : vector<8x64xf32>
    %64 = tpu.matmul %63, %47, %cst_27 {dimension_numbers = #tpu.dot_dimension_numbers<[1], [0], [0], [1], [0, 0, 1, 1], [], []>} : vector<8x8xbf16>, vector<8x64xbf16>, vector<8x64xf32> -> vector<8x64xf32>
    %65 = arith.truncf %64 : vector<8x64xf32> to vector<8x64xbf16>
    %c0_28 = arith.constant 0 : index
    %c64 = arith.constant 64 : index
    %c0_29 = arith.constant 0 : index
    %66 = vector.load %arg9[%c0_28, %c64, %c0_29] : memref<1x128x128xbf16, #tpu.memory_space<vmem>>, vector<1x64x128xbf16>
    %67 = vector.shape_cast %66 : vector<1x64x128xbf16> to vector<64x128xbf16>
    %cst_30 = arith.constant dense<0.000000e+00> : vector<8x128xf32>
    %68 = tpu.matmul %65, %67, %cst_30 {dimension_numbers = #tpu.dot_dimension_numbers<[1], [0], [0], [1], [0, 0, 1, 1], [], []>} : vector<8x64xbf16>, vector<64x128xbf16>, vector<8x128xf32> -> vector<8x128xf32>
    %69 = arith.addf %44, %68 : vector<8x128xf32>
    %70 = vector.extract_strided_slice %16 {offsets = [1, 0], sizes = [1, 128], strides = [1, 1]} : vector<3x128xf32> to vector<1x128xf32>
    %71 = vector.extract_strided_slice %16 {offsets = [2, 0], sizes = [1, 128], strides = [1, 1]} : vector<3x128xf32> to vector<1x128xf32>
    %cst_31 = arith.constant dense<0.000000e+00> : vector<8xf32>
    %72 = vector.multi_reduction <add>, %69, %cst_31 [1] : vector<8x128xf32> to vector<8xf32>
    %73 = vector.shape_cast %72 : vector<8xf32> to vector<8x1xf32>
    %cst_32 = arith.constant 1.280000e+02 : f32
    %74 = vector.broadcast %cst_32 : f32 to vector<8x1xf32>
    %75 = arith.divf %73, %74 : vector<8x1xf32>
    %76 = vector.broadcast %75 : vector<8x1xf32> to vector<8x128xf32>
    %77 = arith.subf %69, %76 : vector<8x128xf32>
    %78 = arith.mulf %77, %77 : vector<8x128xf32>
    %cst_33 = arith.constant dense<0.000000e+00> : vector<8xf32>
    %79 = vector.multi_reduction <add>, %78, %cst_33 [1] : vector<8x128xf32> to vector<8xf32>
    %80 = vector.shape_cast %79 : vector<8xf32> to vector<8x1xf32>
    %cst_34 = arith.constant 1.280000e+02 : f32
    %81 = vector.broadcast %cst_34 : f32 to vector<8x1xf32>
    %82 = arith.divf %80, %81 : vector<8x1xf32>
    %cst_35 = arith.constant 9.99999996E-13 : f32
    %83 = vector.broadcast %cst_35 : f32 to vector<8x1xf32>
    %84 = arith.addf %82, %83 : vector<8x1xf32>
    %85 = math.rsqrt %84 : vector<8x1xf32>
    %86 = vector.broadcast %85 : vector<8x1xf32> to vector<8x128xf32>
    %87 = arith.mulf %77, %86 : vector<8x128xf32>
    %88 = vector.broadcast %70 : vector<1x128xf32> to vector<8x128xf32>
    %89 = arith.mulf %87, %88 : vector<8x128xf32>
    %90 = vector.broadcast %71 : vector<1x128xf32> to vector<8x128xf32>
    %91 = arith.addf %89, %90 : vector<8x128xf32>
    %92 = arith.truncf %91 : vector<8x128xf32> to vector<8x128xbf16>
    %c0_36 = arith.constant 0 : index
    %c0_37 = arith.constant 0 : index
    %c0_38 = arith.constant 0 : index
    %93 = vector.load %arg11[%c0_36, %c0_37, %c0_38] : memref<1x128x256xbf16, #tpu.memory_space<vmem>>, vector<1x128x256xbf16>
    %94 = vector.shape_cast %93 : vector<1x128x256xbf16> to vector<128x256xbf16>
    %cst_39 = arith.constant dense<0.000000e+00> : vector<8x256xf32>
    %95 = tpu.matmul %92, %94, %cst_39 {dimension_numbers = #tpu.dot_dimension_numbers<[1], [0], [0], [1], [0, 0, 1, 1], [], []>} : vector<8x128xbf16>, vector<128x256xbf16>, vector<8x256xf32> -> vector<8x256xf32>
    %c0_40 = arith.constant 0 : index
    %c0_41 = arith.constant 0 : index
    %c0_42 = arith.constant 0 : index
    %96 = vector.load %arg12[%c0_40, %c0_41, %c0_42] : memref<1x1x256xf32, #tpu.memory_space<vmem>>, vector<1x1x256xf32>
    %97 = vector.shape_cast %96 : vector<1x1x256xf32> to vector<1x256xf32>
    %98 = vector.broadcast %97 : vector<1x256xf32> to vector<8x256xf32>
    %99 = arith.addf %95, %98 : vector<8x256xf32>
    %cst_43 = arith.constant 5.000000e-01 : f32
    %100 = vector.broadcast %cst_43 : f32 to vector<8x256xf32>
    %101 = arith.mulf %100, %99 : vector<8x256xf32>
    %cst_44 = arith.constant 4.471500e-02 : f32
    %102 = vector.broadcast %cst_44 : f32 to vector<8x256xf32>
    %103 = arith.mulf %102, %99 : vector<8x256xf32>
    %104 = arith.mulf %103, %99 : vector<8x256xf32>
    %105 = arith.mulf %104, %99 : vector<8x256xf32>
    %106 = arith.addf %99, %105 : vector<8x256xf32>
    %cst_45 = arith.constant 0.797884583 : f32
    %107 = vector.broadcast %cst_45 : f32 to vector<8x256xf32>
    %108 = arith.mulf %107, %106 : vector<8x256xf32>
    %109 = math.tanh %108 : vector<8x256xf32>
    %cst_46 = arith.constant 1.000000e+00 : f32
    %110 = vector.broadcast %cst_46 : f32 to vector<8x256xf32>
    %111 = arith.addf %110, %109 : vector<8x256xf32>
    %112 = arith.mulf %101, %111 : vector<8x256xf32>
    %c0_47 = arith.constant 0 : index
    %c0_48 = arith.constant 0 : index
    %c0_49 = arith.constant 0 : index
    %113 = vector.load %arg14[%c0_47, %c0_48, %c0_49] : memref<1x3x128xf32, #tpu.memory_space<vmem>>, vector<1x3x128xf32>
    %114 = vector.shape_cast %113 : vector<1x3x128xf32> to vector<3x128xf32>
    %115 = arith.truncf %112 : vector<8x256xf32> to vector<8x256xbf16>
    %c0_50 = arith.constant 0 : index
    %c0_51 = arith.constant 0 : index
    %c0_52 = arith.constant 0 : index
    %116 = vector.load %arg13[%c0_50, %c0_51, %c0_52] : memref<1x256x128xbf16, #tpu.memory_space<vmem>>, vector<1x256x128xbf16>
    %117 = vector.shape_cast %116 : vector<1x256x128xbf16> to vector<256x128xbf16>
    %cst_53 = arith.constant dense<0.000000e+00> : vector<8x128xf32>
    %118 = tpu.matmul %115, %117, %cst_53 {dimension_numbers = #tpu.dot_dimension_numbers<[1], [0], [0], [1], [0, 0, 1, 1], [], []>} : vector<8x256xbf16>, vector<256x128xbf16>, vector<8x128xf32> -> vector<8x128xf32>
    %119 = vector.extract_strided_slice %114 {offsets = [0, 0], sizes = [1, 128], strides = [1, 1]} : vector<3x128xf32> to vector<1x128xf32>
    %120 = vector.broadcast %119 : vector<1x128xf32> to vector<8x128xf32>
    %121 = arith.addf %118, %120 : vector<8x128xf32>
    %122 = arith.addf %121, %91 : vector<8x128xf32>
    %123 = vector.extract_strided_slice %114 {offsets = [1, 0], sizes = [1, 128], strides = [1, 1]} : vector<3x128xf32> to vector<1x128xf32>
    %124 = vector.extract_strided_slice %114 {offsets = [2, 0], sizes = [1, 128], strides = [1, 1]} : vector<3x128xf32> to vector<1x128xf32>
    %cst_54 = arith.constant dense<0.000000e+00> : vector<8xf32>
    %125 = vector.multi_reduction <add>, %122, %cst_54 [1] : vector<8x128xf32> to vector<8xf32>
    %126 = vector.shape_cast %125 : vector<8xf32> to vector<8x1xf32>
    %cst_55 = arith.constant 1.280000e+02 : f32
    %127 = vector.broadcast %cst_55 : f32 to vector<8x1xf32>
    %128 = arith.divf %126, %127 : vector<8x1xf32>
    %129 = vector.broadcast %128 : vector<8x1xf32> to vector<8x128xf32>
    %130 = arith.subf %122, %129 : vector<8x128xf32>
    %131 = arith.mulf %130, %130 : vector<8x128xf32>
    %cst_56 = arith.constant dense<0.000000e+00> : vector<8xf32>
    %132 = vector.multi_reduction <add>, %131, %cst_56 [1] : vector<8x128xf32> to vector<8xf32>
    %133 = vector.shape_cast %132 : vector<8xf32> to vector<8x1xf32>
    %cst_57 = arith.constant 1.280000e+02 : f32
    %134 = vector.broadcast %cst_57 : f32 to vector<8x1xf32>
    %135 = arith.divf %133, %134 : vector<8x1xf32>
    %cst_58 = arith.constant 9.99999996E-13 : f32
    %136 = vector.broadcast %cst_58 : f32 to vector<8x1xf32>
    %137 = arith.addf %135, %136 : vector<8x1xf32>
    %138 = math.rsqrt %137 : vector<8x1xf32>
    %139 = vector.broadcast %138 : vector<8x1xf32> to vector<8x128xf32>
    %140 = arith.mulf %130, %139 : vector<8x128xf32>
    %141 = vector.broadcast %123 : vector<1x128xf32> to vector<8x128xf32>
    %142 = arith.mulf %140, %141 : vector<8x128xf32>
    %143 = vector.broadcast %124 : vector<1x128xf32> to vector<8x128xf32>
    %144 = arith.addf %142, %143 : vector<8x128xf32>
    %c0_59 = arith.constant 0 : index
    %c0_60 = arith.constant 0 : index
    %145 = vector.load %arg20[%c0_59, %c0_60] : memref<8x128xf32, #tpu.memory_space<vmem>>, vector<8x128xf32>
    tpu.vector_store %arg20[%c0_59, %c0_60], %144 {strides = array<i32>} : memref<8x128xf32, #tpu.memory_space<vmem>>, vector<8x128xf32>,
    %c1_i32 = arith.constant 1 : i32
    %146 = arith.cmpi eq, %arg1, %c1_i32 : i32
    %147 = arith.extui %146 : i1 to i32
    %c0_i32_61 = arith.constant 0 : i32
    %148 = arith.cmpi ne, %147, %c0_i32_61 : i32
    scf.if %148 {
      %149 = arith.truncf %144 : vector<8x128xf32> to vector<8x128xbf16>
      %c0_62 = arith.constant 0 : index
      %c0_63 = arith.constant 0 : index
      %150 = vector.load %arg15[%c0_62, %c0_63] : memref<128x128xbf16, #tpu.memory_space<vmem>>, vector<128x128xbf16>
      %cst_64 = arith.constant dense<0.000000e+00> : vector<8x128xf32>
      %151 = tpu.matmul %149, %150, %cst_64 {dimension_numbers = #tpu.dot_dimension_numbers<[1], [0], [0], [1], [0, 0, 1, 1], [], []>} : vector<8x128xbf16>, vector<128x128xbf16>, vector<8x128xf32> -> vector<8x128xf32>
      %c0_65 = arith.constant 0 : index
      %c0_66 = arith.constant 0 : index
      %152 = vector.load %arg16[%c0_65, %c0_66] : memref<1x128xf32, #tpu.memory_space<vmem>>, vector<1x128xf32>
      %153 = vector.broadcast %152 : vector<1x128xf32> to vector<8x128xf32>
      %154 = arith.addf %151, %153 : vector<8x128xf32>
      %155 = math.tanh %154 : vector<8x128xf32>
      %156 = arith.truncf %155 : vector<8x128xf32> to vector<8x128xbf16>
      %c0_67 = arith.constant 0 : index
      %c0_68 = arith.constant 0 : index
      %157 = vector.load %arg17[%c0_67, %c0_68] : memref<128x128xbf16, #tpu.memory_space<vmem>>, vector<128x128xbf16>
      %cst_69 = arith.constant dense<0.000000e+00> : vector<8x128xf32>
      %158 = tpu.matmul %156, %157, %cst_69 {dimension_numbers = #tpu.dot_dimension_numbers<[1], [0], [0], [1], [0, 0, 1, 1], [], []>} : vector<8x128xbf16>, vector<128x128xbf16>, vector<8x128xf32> -> vector<8x128xf32>
      %c0_70 = arith.constant 0 : index
      %c0_71 = arith.constant 0 : index
      %159 = vector.load %arg18[%c0_70, %c0_71] : memref<1x128xf32, #tpu.memory_space<vmem>>, vector<1x128xf32>
      %160 = vector.broadcast %159 : vector<1x128xf32> to vector<8x128xf32>
      %161 = arith.addf %158, %160 : vector<8x128xf32>
      %162 = vector.extract_strided_slice %161 {offsets = [0, 0], sizes = [1, 128], strides = [1, 1]} : vector<8x128xf32> to vector<1x128xf32>
      %cst_72 = arith.constant dense<0xFF800000> : vector<1xf32>
      %163 = vector.multi_reduction <maximumf>, %162, %cst_72 [1] : vector<1x128xf32> to vector<1xf32>
      %164 = vector.shape_cast %163 : vector<1xf32> to vector<1x1xf32>
      %165 = vector.broadcast %164 : vector<1x1xf32> to vector<1x128xf32>
      %166 = arith.subf %162, %165 : vector<1x128xf32>
      %167 = math.exp %166 : vector<1x128xf32>
      %cst_73 = arith.constant dense<0.000000e+00> : vector<1xf32>
      %168 = vector.multi_reduction <add>, %167, %cst_73 [1] : vector<1x128xf32> to vector<1xf32>
      %169 = vector.shape_cast %168 : vector<1xf32> to vector<1x1xf32>
      %170 = vector.broadcast %169 : vector<1x1xf32> to vector<1x128xf32>
      %171 = arith.divf %167, %170 : vector<1x128xf32>
      %c0_74 = arith.constant 0 : index
      %c0_75 = arith.constant 0 : index
      %c0_76 = arith.constant 0 : index
      %172 = vector.load %arg19[%c0_74, %c0_75, %c0_76] : memref<1x1x128xf32, #tpu.memory_space<vmem>>, vector<1x1x128xf32>
      %173 = vector.shape_cast %172 : vector<1x1x128xf32> to vector<1x128xf32>
      %174 = vector.shape_cast %171 : vector<1x128xf32> to vector<1x1x128xf32>
      tpu.vector_store %arg19[%c0_74, %c0_75, %c0_76], %174 {strides = array<i32>} : memref<1x1x128xf32, #tpu.memory_space<vmem>>, vector<1x1x128xf32>,
    } else {
    }
    return
  }
  func.func @transform_0(%arg0: i32, %arg1: i32) -> (i32, i32, i32) {
    %c0_i32 = arith.constant 0 : i32
    %c0_i32_0 = arith.constant 0 : i32
    %c0_i32_1 = arith.constant 0 : i32
    return %arg0, %c0_i32, %c0_i32_0 : i32, i32, i32
  }
  func.func @transform_1(%arg0: i32, %arg1: i32) -> (i32, i32, i32) {
    %c0_i32 = arith.constant 0 : i32
    %c0_i32_0 = arith.constant 0 : i32
    %c0_i32_1 = arith.constant 0 : i32
    return %arg0, %c0_i32, %c0_i32_0 : i32, i32, i32
  }
  func.func @transform_2(%arg0: i32, %arg1: i32) -> (i32, i32, i32) {
    %c0_i32 = arith.constant 0 : i32
    %c0_i32_0 = arith.constant 0 : i32
    %c0_i32_1 = arith.constant 0 : i32
    %c0_i32_2 = arith.constant 0 : i32
    return %c0_i32, %c0_i32_0, %c0_i32_1 : i32, i32, i32
  }
  func.func @transform_3(%arg0: i32, %arg1: i32) -> (i32, i32) {
    %c0_i32 = arith.constant 0 : i32
    %c0_i32_0 = arith.constant 0 : i32
    %c0_i32_1 = arith.constant 0 : i32
    return %c0_i32, %c0_i32_0 : i32, i32
  }
  func.func @transform_4(%arg0: i32, %arg1: i32) -> (i32, i32, i32) {
    %c0_i32 = arith.constant 0 : i32
    %c0_i32_0 = arith.constant 0 : i32
    %c0_i32_1 = arith.constant 0 : i32
    return %arg0, %c0_i32, %c0_i32_0 : i32, i32, i32
  }
  func.func @transform_5(%arg0: i32, %arg1: i32) -> (i32, i32, i32) {
    %c0_i32 = arith.constant 0 : i32
    %c0_i32_0 = arith.constant 0 : i32
    %c0_i32_1 = arith.constant 0 : i32
    return %arg1, %c0_i32, %c0_i32_0 : i32, i32, i32
  }
  func.func @transform_6(%arg0: i32, %arg1: i32) -> (i32, i32, i32) {
    %c0_i32 = arith.constant 0 : i32
    %c0_i32_0 = arith.constant 0 : i32
    %c0_i32_1 = arith.constant 0 : i32
    return %arg1, %c0_i32, %c0_i32_0 : i32, i32, i32
  }
  func.func @transform_7(%arg0: i32, %arg1: i32) -> (i32, i32, i32) {
    %c0_i32 = arith.constant 0 : i32
    %c0_i32_0 = arith.constant 0 : i32
    %c0_i32_1 = arith.constant 0 : i32
    return %arg1, %c0_i32, %c0_i32_0 : i32, i32, i32
  }
  func.func @transform_8(%arg0: i32, %arg1: i32) -> (i32, i32, i32) {
    %c0_i32 = arith.constant 0 : i32
    %c0_i32_0 = arith.constant 0 : i32
    %c0_i32_1 = arith.constant 0 : i32
    return %arg1, %c0_i32, %c0_i32_0 : i32, i32, i32
  }
  func.func @transform_9(%arg0: i32, %arg1: i32) -> (i32, i32, i32) {
    %c0_i32 = arith.constant 0 : i32
    %c0_i32_0 = arith.constant 0 : i32
    %c0_i32_1 = arith.constant 0 : i32
    return %arg1, %c0_i32, %c0_i32_0 : i32, i32, i32
  }
  func.func @transform_10(%arg0: i32, %arg1: i32) -> (i32, i32, i32) {
    %c0_i32 = arith.constant 0 : i32
    %c0_i32_0 = arith.constant 0 : i32
    %c0_i32_1 = arith.constant 0 : i32
    return %arg1, %c0_i32, %c0_i32_0 : i32, i32, i32
  }
  func.func @transform_11(%arg0: i32, %arg1: i32) -> (i32, i32, i32) {
    %c0_i32 = arith.constant 0 : i32
    %c0_i32_0 = arith.constant 0 : i32
    %c0_i32_1 = arith.constant 0 : i32
    return %arg1, %c0_i32, %c0_i32_0 : i32, i32, i32
  }
  func.func @transform_12(%arg0: i32, %arg1: i32) -> (i32, i32, i32) {
    %c0_i32 = arith.constant 0 : i32
    %c0_i32_0 = arith.constant 0 : i32
    %c0_i32_1 = arith.constant 0 : i32
    return %arg1, %c0_i32, %c0_i32_0 : i32, i32, i32
  }
  func.func @transform_13(%arg0: i32, %arg1: i32) -> (i32, i32) {
    %c0_i32 = arith.constant 0 : i32
    %c0_i32_0 = arith.constant 0 : i32
    %c0_i32_1 = arith.constant 0 : i32
    return %c0_i32, %c0_i32_0 : i32, i32
  }
  func.func @transform_14(%arg0: i32, %arg1: i32) -> (i32, i32) {
    %c0_i32 = arith.constant 0 : i32
    %c0_i32_0 = arith.constant 0 : i32
    %c0_i32_1 = arith.constant 0 : i32
    return %c0_i32, %c0_i32_0 : i32, i32
  }
  func.func @transform_15(%arg0: i32, %arg1: i32) -> (i32, i32) {
    %c0_i32 = arith.constant 0 : i32
    %c0_i32_0 = arith.constant 0 : i32
    %c0_i32_1 = arith.constant 0 : i32
    return %c0_i32, %c0_i32_0 : i32, i32
  }
  func.func @transform_16(%arg0: i32, %arg1: i32) -> (i32, i32) {
    %c0_i32 = arith.constant 0 : i32
    %c0_i32_0 = arith.constant 0 : i32
    %c0_i32_1 = arith.constant 0 : i32
    return %c0_i32, %c0_i32_0 : i32, i32
  }
  func.func @transform_17(%arg0: i32, %arg1: i32) -> (i32, i32, i32) {
    %c0_i32 = arith.constant 0 : i32
    %c0_i32_0 = arith.constant 0 : i32
    %c0_i32_1 = arith.constant 0 : i32
    return %arg0, %c0_i32, %c0_i32_0 : i32, i32, i32
  }
}

</mosaic_0001>

<llo_original>
// kernel: bert_classifier_forward.1
$region0: #{bert_classifier_forward.1}
  #allocation0 [shape = 'u32[]', space=smem, size = 0x4, offset = 0x4, fixed_abs, tag = 'smem constant byte address 0x4 - core index']
  #allocation1 [shape = 'u32[144,128]{1,0:T(1,128)}', space=vmem, size = 0x12000, scoped, tag = 'internal scratch']
  #allocation2 [shape = 'f32[8,128]{1,0:T(8,128)}', space=vmem, size = 0x1000, scoped, tag = 'scratch operand']
  %s0 = inlined_call_operand.vmem [shape: f32[2,8,128], index: 0, kind: input, shape index: {}]
  %s1 = inlined_call_operand.vmem [shape: f32[2,8,128], index: 1, kind: input, shape index: {}]
  %s2 = inlined_call_operand.vmem [shape: f32[1,8,128], index: 2, kind: input, shape index: {}]
  %s3 = inlined_call_operand.vmem [shape: f32[2,128], index: 3, kind: input, shape index: {}]
  %s4 = inlined_call_operand.vmem [shape: f32[2,1,8], index: 4, kind: input, shape index: {}]
  %s5 = inlined_call_operand.hbm [shape: bf16[2,128,384], index: 5, kind: input, shape index: {}]
  %s6 = inlined_call_operand.vmem [shape: f32[2,1,384], index: 6, kind: input, shape index: {}]
  %s7 = inlined_call_operand.vmem [shape: bf16[2,128,128], index: 7, kind: input, shape index: {}]
  %s8 = inlined_call_operand.vmem [shape: f32[2,3,128], index: 8, kind: input, shape index: {}]
  %s9 = inlined_call_operand.vmem [shape: bf16[2,128,256], index: 9, kind: input, shape index: {}]
  %s10 = inlined_call_operand.vmem [shape: f32[2,1,256], index: 10, kind: input, shape index: {}]
  %s11 = inlined_call_operand.hbm [shape: bf16[2,256,128], index: 11, kind: input, shape index: {}]
  %s12 = inlined_call_operand.vmem [shape: f32[2,3,128], index: 12, kind: input, shape index: {}]
  %s13 = inlined_call_operand.vmem [shape: bf16[128,128], index: 13, kind: input, shape index: {}]
  %s14 = inlined_call_operand.vmem [shape: f32[1,128], index: 14, kind: input, shape index: {}]
  %s15 = inlined_call_operand.hbm [shape: bf16[128,128], index: 15, kind: input, shape index: {}]
  %s16 = inlined_call_operand.vmem [shape: f32[1,128], index: 16, kind: input, shape index: {}]
  %s17 = inlined_call_operand.hbm [shape: f32[2,1,128], index: 17, kind: output, shape index: {}]
  %s18 = sld [smem:[#allocation0]]
  $region121: #{bert_classifier_forward.1} parent=0
    _
  %s20 = ssub.s32 1, %s18
  %s21 = scalar_select 0, %s20, %s18
  $region1: #{bert_classifier_forward.1} parent=0
    #allocation3 [shape = 'u8[196608]{0}', space=vmem, size = 0x30000, scoped, tag = 'input window, operand 5']
    #allocation4 [shape = 's32[2]{0}', space=sflag, size = 0x8, scoped, tag = 'scoped memory for bert_classifier_forward.1']
    #allocation5 [shape = 's32[2]{0}', space=sflag, size = 0x8, scoped, tag = 'scoped memory for bert_classifier_forward.1']
    #allocation6 [shape = 'u8[131072]{0}', space=vmem, size = 0x20000, scoped, tag = 'input window, operand 11']
    #allocation7 [shape = 's32[2]{0}', space=sflag, size = 0x8, scoped, tag = 'scoped memory for bert_classifier_forward.1']
    #allocation8 [shape = 'u8[32768]{0}', space=vmem, size = 0x8000, scoped, tag = 'input window, operand 15, single buffered']
    #allocation9 [shape = 'u8[1024]{0}', space=vmem, size = 0x400, scoped, tag = 'output window, operand 0']
    %22 = vsyncpa [#allocation4], 0
    %s23 = scalar_lea.sflag [#allocation4], 1
    %24 = vsyncpa %s23, 0
    %25 = vsyncpa [#allocation7], 0
    %s26 = scalar_lea.sflag [#allocation7], 1
    %27 = vsyncpa %s26, 0
    %28 = vsyncpa [#allocation5], 0
    %s29 = scalar_lea.sflag [#allocation5], 1
    %30 = vsyncpa %s29, 0
    loop: start=0, step=1, limit=6
    $region2: #{bert_classifier_forward.1} parent=1 // loop_pre_header
      _
    $region3: #{bert_classifier_forward.1} parent=1 // loop_header
      %s32 = sphi 0, %s36
      %p33 = scmp.ge.s32.totalorder %s32, 6
      %s39 = sphi 0, %s51
      %s40 = sphi 0, %s47
      %s41 = sphi 0, %s39
      %s42 = sphi 0, %s40
      %s43 = sphi 0, %s41
      %s44 = sphi 0, %s42
      %s54 = sphi 0, %s56
      %s57 = sphi 0, %s54
      %s58 = sphi 0, %s57
      %s74 = sphi 0, %s58
      %s80 = sphi 0, %s82
      %s83 = sphi 0, %s80
      %s84 = sphi 0, %s83
      %s100 = sphi 0, %s84
      %s104 = sphi 0, %s104
      %s106 = sphi 0, %s104
      %s107 = sphi 0, %s106
      %s121 = sphi 0, %s107
      %s125 = sphi 0, %s125
      %s127 = sphi 0, %s125
      %s128 = sphi 0, %s127
      %s142 = sphi 0, %s128
      %s148 = sphi 0, %s150
      %s151 = sphi 0, %s148
      %s152 = sphi 0, %s151
      %s168 = sphi 0, %s152
      %s174 = sphi 0, %s176
      %s177 = sphi 0, %s174
      %s178 = sphi 0, %s177
      %s194 = sphi 0, %s178
      %s200 = sphi 0, %s202
      %s203 = sphi 0, %s200
      %s204 = sphi 0, %s203
      %s220 = sphi 0, %s204
      %s226 = sphi 0, %s228
      %s229 = sphi 0, %s226
      %s230 = sphi 0, %s229
      %s246 = sphi 0, %s230
      %s252 = sphi 0, %s254
      %s255 = sphi 0, %s252
      %s256 = sphi 0, %s255
      %s272 = sphi 0, %s256
      %s278 = sphi 0, %s280
      %s281 = sphi 0, %s278
      %s282 = sphi 0, %s281
      %s298 = sphi 0, %s282
      %s304 = sphi 0, %s306
      %s307 = sphi 0, %s304
      %s308 = sphi 0, %s307
      %s324 = sphi 0, %s308
      %s330 = sphi 0, %s332
      %s333 = sphi 0, %s330
      %s334 = sphi 0, %s333
      %s350 = sphi 0, %s334
      %s356 = sphi 0, %s358
      %s359 = sphi 0, %s356
      %s360 = sphi 0, %s359
      %s376 = sphi 0, %s360
      %s380 = sphi 0, %s380
      %s382 = sphi 0, %s380
      %s383 = sphi 0, %s382
      %s397 = sphi 0, %s383
      %s401 = sphi 0, %s401
      %s403 = sphi 0, %s401
      %s404 = sphi 0, %s403
      %s418 = sphi 0, %s404
      %s422 = sphi 0, %s422
      %s424 = sphi 0, %s422
      %s425 = sphi 0, %s424
      %s439 = sphi 0, %s425
      %s443 = sphi 0, %s443
      %s445 = sphi 0, %s443
      %s446 = sphi 0, %s445
      %s460 = sphi 0, %s446
      %s466 = sphi 0, %s468
      %s469 = sphi 0, %s466
      %s470 = sphi 0, %s469
      %s486 = sphi 0, %s470
    $region4: #{bert_classifier_forward.1} parent=1 // loop_header_branch
      %35 = sbr.rel (%p33) target = $region8
    $region5: #{bert_classifier_forward.1} parent=1 // loop_body
      %s37 = ssub.s32 %s32, 1
      %s38 = ssub.s32 %s32, 2
      %s45 = sadd.s32 1, %s40
      %p46 = scmp.ge.s32.totalorder %s45, 2
      %s47 = scalar_select %p46, 0, %s45
      %s48 = sadd.s32 1, %s39
      %s49 = scalar_select %p46, %s48, %s39
      %p50 = scmp.ge.s32.totalorder %s49, 2
      %s51 = scalar_select %p50, 0, %s49
      %s52 = ssub.s32 %s39, %s51
      %p53 = scmp.eq.s32.totalorder %s52, 0
      %s55 = sadd.s32 %s54, 1
      %s56 = scalar_select %p53, %s54, %s55
      %p59 = pneg %p53
      %p60 = scmp.eq.s32.totalorder %s32, 3
      %p61 = por %p59, %p60
      %p62 = scmp.ne.s32.totalorder %s54, %s57
      %p63 = scmp.eq.s32.totalorder %s32, 0
      %p64 = por %p62, %p63
      %p65 = scmp.ne.s32.totalorder %s54, %s57
      %p66 = scmp.eq.s32.totalorder %s37, 3
      %p67 = por %p65, %p66
      %p68 = scmp.ne.s32.totalorder %s57, %s58
      %p69 = scmp.eq.s32.totalorder %s37, 0
      %p70 = por %p68, %p69
      %p71 = scmp.ne.s32.totalorder %s57, %s58
      %p72 = scmp.eq.s32.totalorder %s38, 3
      %p73 = por %p71, %p72
      %p75 = scmp.ne.s32.totalorder %s58, %s74
      %p76 = scmp.eq.s32.totalorder %s38, 0
      %p77 = por %p75, %p76
      %s78 = ssub.s32 %s39, %s51
      %p79 = scmp.eq.s32.totalorder %s78, 0
      %s81 = sadd.s32 %s80, 1
      %s82 = scalar_select %p79, %s80, %s81
      %p85 = pneg %p79
      %p86 = scmp.eq.s32.totalorder %s32, 3
      %p87 = por %p85, %p86
      %p88 = scmp.ne.s32.totalorder %s80, %s83
      %p89 = scmp.eq.s32.totalorder %s32, 0
      %p90 = por %p88, %p89
      %p91 = scmp.ne.s32.totalorder %s80, %s83
      %p92 = scmp.eq.s32.totalorder %s37, 3
      %p93 = por %p91, %p92
      %p94 = scmp.ne.s32.totalorder %s83, %s84
      %p95 = scmp.eq.s32.totalorder %s37, 0
      %p96 = por %p94, %p95
      %p97 = scmp.ne.s32.totalorder %s83, %s84
      %p98 = scmp.eq.s32.totalorder %s38, 3
      %p99 = por %p97, %p98
      %p101 = scmp.ne.s32.totalorder %s84, %s100
      %p102 = scmp.eq.s32.totalorder %s38, 0
      %p103 = por %p101, %p102
      %s105 = sadd.s32 %s104, 1
      %p108 = scmp.eq.s32.totalorder %s32, 3
      %p109 = scmp.ne.s32.totalorder %s104, %s106
      %p110 = scmp.eq.s32.totalorder %s32, 0
      %p111 = por %p109, %p110
      %p112 = scmp.ne.s32.totalorder %s104, %s106
      %p113 = scmp.eq.s32.totalorder %s37, 3
      %p114 = por %p112, %p113
      %p115 = scmp.ne.s32.totalorder %s106, %s107
      %p116 = scmp.eq.s32.totalorder %s37, 0
      %p117 = por %p115, %p116
      %p118 = scmp.ne.s32.totalorder %s106, %s107
      %p119 = scmp.eq.s32.totalorder %s38, 3
      %p120 = por %p118, %p119
      %p122 = scmp.ne.s32.totalorder %s107, %s121
      %p123 = scmp.eq.s32.totalorder %s38, 0
      %p124 = por %p122, %p123
      %s126 = sadd.s32 %s125, 1
      %p129 = scmp.eq.s32.totalorder %s32, 3
      %p130 = scmp.ne.s32.totalorder %s125, %s127
      %p131 = scmp.eq.s32.totalorder %s32, 0
      %p132 = por %p130, %p131
      %p133 = scmp.ne.s32.totalorder %s125, %s127
      %p134 = scmp.eq.s32.totalorder %s37, 3
      %p135 = por %p133, %p134
      %p136 = scmp.ne.s32.totalorder %s127, %s128
      %p137 = scmp.eq.s32.totalorder %s37, 0
      %p138 = por %p136, %p137
      %p139 = scmp.ne.s32.totalorder %s127, %s128
      %p140 = scmp.eq.s32.totalorder %s38, 3
      %p141 = por %p139, %p140
      %p143 = scmp.ne.s32.totalorder %s128, %s142
      %p144 = scmp.eq.s32.totalorder %s38, 0
      %p145 = por %p143, %p144
      %s146 = ssub.s32 %s39, %s51
      %p147 = scmp.eq.s32.totalorder %s146, 0
      %s149 = sadd.s32 %s148, 1
      %s150 = scalar_select %p147, %s148, %s149
      %p153 = pneg %p147
      %p154 = scmp.eq.s32.totalorder %s32, 3
      %p155 = por %p153, %p154
      %p156 = scmp.ne.s32.totalorder %s148, %s151
      %p157 = scmp.eq.s32.totalorder %s32, 0
      %p158 = por %p156, %p157
      %p159 = scmp.ne.s32.totalorder %s148, %s151
      %p160 = scmp.eq.s32.totalorder %s37, 3
      %p161 = por %p159, %p160
      %p162 = scmp.ne.s32.totalorder %s151, %s152
      %p163 = scmp.eq.s32.totalorder %s37, 0
      %p164 = por %p162, %p163
      %p165 = scmp.ne.s32.totalorder %s151, %s152
      %p166 = scmp.eq.s32.totalorder %s38, 3
      %p167 = por %p165, %p166
      %p169 = scmp.ne.s32.totalorder %s152, %s168
      %p170 = scmp.eq.s32.totalorder %s38, 0
      %p171 = por %p169, %p170
      %s172 = ssub.s32 %s40, %s47
      %p173 = scmp.eq.s32.totalorder %s172, 0
      %s175 = sadd.s32 %s174, 1
      %s176 = scalar_select %p173, %s174, %s175
      %p179 = pneg %p173
      %p180 = scmp.eq.s32.totalorder %s32, 3
      %p181 = por %p179, %p180
      %p182 = scmp.ne.s32.totalorder %s174, %s177
      %p183 = scmp.eq.s32.totalorder %s32, 0
      %p184 = por %p182, %p183
      %p185 = scmp.ne.s32.totalorder %s174, %s177
      %p186 = scmp.eq.s32.totalorder %s37, 3
      %p187 = por %p185, %p186
      %p188 = scmp.ne.s32.totalorder %s177, %s178
      %p189 = scmp.eq.s32.totalorder %s37, 0
      %p190 = por %p188, %p189
      %p191 = scmp.ne.s32.totalorder %s177, %s178
      %p192 = scmp.eq.s32.totalorder %s38, 3
      %p193 = por %p191, %p192
      %p195 = scmp.ne.s32.totalorder %s178, %s194
      %p196 = scmp.eq.s32.totalorder %s38, 0
      %p197 = por %p195, %p196
      %s198 = ssub.s32 %s40, %s47
      %p199 = scmp.eq.s32.totalorder %s198, 0
      %s201 = sadd.s32 %s200, 1
      %s202 = scalar_select %p199, %s200, %s201
      %p205 = pneg %p199
      %p206 = scmp.eq.s32.totalorder %s32, 3
      %p207 = por %p205, %p206
      %p208 = scmp.ne.s32.totalorder %s200, %s203
      %p209 = scmp.eq.s32.totalorder %s32, 0
      %p210 = por %p208, %p209
      %p211 = scmp.ne.s32.totalorder %s200, %s203
      %p212 = scmp.eq.s32.totalorder %s37, 3
      %p213 = por %p211, %p212
      %p214 = scmp.ne.s32.totalorder %s203, %s204
      %p215 = scmp.eq.s32.totalorder %s37, 0
      %p216 = por %p214, %p215
      %p217 = scmp.ne.s32.totalorder %s203, %s204
      %p218 = scmp.eq.s32.totalorder %s38, 3
      %p219 = por %p217, %p218
      %p221 = scmp.ne.s32.totalorder %s204, %s220
      %p222 = scmp.eq.s32.totalorder %s38, 0
      %p223 = por %p221, %p222
      %s224 = ssub.s32 %s40, %s47
      %p225 = scmp.eq.s32.totalorder %s224, 0
      %s227 = sadd.s32 %s226, 1
      %s228 = scalar_select %p225, %s226, %s227
      %p231 = pneg %p225
      %p232 = scmp.eq.s32.totalorder %s32, 3
      %p233 = por %p231, %p232
      %p234 = scmp.ne.s32.totalorder %s226, %s229
      %p235 = scmp.eq.s32.totalorder %s32, 0
      %p236 = por %p234, %p235
      %p237 = scmp.ne.s32.totalorder %s226, %s229
      %p238 = scmp.eq.s32.totalorder %s37, 3
      %p239 = por %p237, %p238
      %p240 = scmp.ne.s32.totalorder %s229, %s230
      %p241 = scmp.eq.s32.totalorder %s37, 0
      %p242 = por %p240, %p241
      %p243 = scmp.ne.s32.totalorder %s229, %s230
      %p244 = scmp.eq.s32.totalorder %s38, 3
      %p245 = por %p243, %p244
      %p247 = scmp.ne.s32.totalorder %s230, %s246
      %p248 = scmp.eq.s32.totalorder %s38, 0
      %p249 = por %p247, %p248
      %s250 = ssub.s32 %s40, %s47
      %p251 = scmp.eq.s32.totalorder %s250, 0
      %s253 = sadd.s32 %s252, 1
      %s254 = scalar_select %p251, %s252, %s253
      %p257 = pneg %p251
      %p258 = scmp.eq.s32.totalorder %s32, 3
      %p259 = por %p257, %p258
      %p260 = scmp.ne.s32.totalorder %s252, %s255
      %p261 = scmp.eq.s32.totalorder %s32, 0
      %p262 = por %p260, %p261
      %p263 = scmp.ne.s32.totalorder %s252, %s255
      %p264 = scmp.eq.s32.totalorder %s37, 3
      %p265 = por %p263, %p264
      %p266 = scmp.ne.s32.totalorder %s255, %s256
      %p267 = scmp.eq.s32.totalorder %s37, 0
      %p268 = por %p266, %p267
      %p269 = scmp.ne.s32.totalorder %s255, %s256
      %p270 = scmp.eq.s32.totalorder %s38, 3
      %p271 = por %p269, %p270
      %p273 = scmp.ne.s32.totalorder %s256, %s272
      %p274 = scmp.eq.s32.totalorder %s38, 0
      %p275 = por %p273, %p274
      %s276 = ssub.s32 %s40, %s47
      %p277 = scmp.eq.s32.totalorder %s276, 0
      %s279 = sadd.s32 %s278, 1
      %s280 = scalar_select %p277, %s278, %s279
      %p283 = pneg %p277
      %p284 = scmp.eq.s32.totalorder %s32, 3
      %p285 = por %p283, %p284
      %p286 = scmp.ne.s32.totalorder %s278, %s281
      %p287 = scmp.eq.s32.totalorder %s32, 0
      %p288 = por %p286, %p287
      %p289 = scmp.ne.s32.totalorder %s278, %s281
      %p290 = scmp.eq.s32.totalorder %s37, 3
      %p291 = por %p289, %p290
      %p292 = scmp.ne.s32.totalorder %s281, %s282
      %p293 = scmp.eq.s32.totalorder %s37, 0
      %p294 = por %p292, %p293
      %p295 = scmp.ne.s32.totalorder %s281, %s282
      %p296 = scmp.eq.s32.totalorder %s38, 3
      %p297 = por %p295, %p296
      %p299 = scmp.ne.s32.totalorder %s282, %s298
      %p300 = scmp.eq.s32.totalorder %s38, 0
      %p301 = por %p299, %p300
      %s302 = ssub.s32 %s40, %s47
      %p303 = scmp.eq.s32.totalorder %s302, 0
      %s305 = sadd.s32 %s304, 1
      %s306 = scalar_select %p303, %s304, %s305
      %p309 = pneg %p303
      %p310 = scmp.eq.s32.totalorder %s32, 3
      %p311 = por %p309, %p310
      %p312 = scmp.ne.s32.totalorder %s304, %s307
      %p313 = scmp.eq.s32.totalorder %s32, 0
      %p314 = por %p312, %p313
      %p315 = scmp.ne.s32.totalorder %s304, %s307
      %p316 = scmp.eq.s32.totalorder %s37, 3
      %p317 = por %p315, %p316
      %p318 = scmp.ne.s32.totalorder %s307, %s308
      %p319 = scmp.eq.s32.totalorder %s37, 0
      %p320 = por %p318, %p319
      %p321 = scmp.ne.s32.totalorder %s307, %s308
      %p322 = scmp.eq.s32.totalorder %s38, 3
      %p323 = por %p321, %p322
      %p325 = scmp.ne.s32.totalorder %s308, %s324
      %p326 = scmp.eq.s32.totalorder %s38, 0
      %p327 = por %p325, %p326
      %s328 = ssub.s32 %s40, %s47
      %p329 = scmp.eq.s32.totalorder %s328, 0
      %s331 = sadd.s32 %s330, 1
      %s332 = scalar_select %p329, %s330, %s331
      %p335 = pneg %p329
      %p336 = scmp.eq.s32.totalorder %s32, 3
      %p337 = por %p335, %p336
      %p338 = scmp.ne.s32.totalorder %s330, %s333
      %p339 = scmp.eq.s32.totalorder %s32, 0
      %p340 = por %p338, %p339
      %p341 = scmp.ne.s32.totalorder %s330, %s333
      %p342 = scmp.eq.s32.totalorder %s37, 3
      %p343 = por %p341, %p342
      %p344 = scmp.ne.s32.totalorder %s333, %s334
      %p345 = scmp.eq.s32.totalorder %s37, 0
      %p346 = por %p344, %p345
      %p347 = scmp.ne.s32.totalorder %s333, %s334
      %p348 = scmp.eq.s32.totalorder %s38, 3
      %p349 = por %p347, %p348
      %p351 = scmp.ne.s32.totalorder %s334, %s350
      %p352 = scmp.eq.s32.totalorder %s38, 0
      %p353 = por %p351, %p352
      %s354 = ssub.s32 %s40, %s47
      %p355 = scmp.eq.s32.totalorder %s354, 0
      %s357 = sadd.s32 %s356, 1
      %s358 = scalar_select %p355, %s356, %s357
      %p361 = pneg %p355
      %p362 = scmp.eq.s32.totalorder %s32, 3
      %p363 = por %p361, %p362
      %p364 = scmp.ne.s32.totalorder %s356, %s359
      %p365 = scmp.eq.s32.totalorder %s32, 0
      %p366 = por %p364, %p365
      %p367 = scmp.ne.s32.totalorder %s356, %s359
      %p368 = scmp.eq.s32.totalorder %s37, 3
      %p369 = por %p367, %p368
      %p370 = scmp.ne.s32.totalorder %s359, %s360
      %p371 = scmp.eq.s32.totalorder %s37, 0
      %p372 = por %p370, %p371
      %p373 = scmp.ne.s32.totalorder %s359, %s360
      %p374 = scmp.eq.s32.totalorder %s38, 3
      %p375 = por %p373, %p374
      %p377 = scmp.ne.s32.totalorder %s360, %s376
      %p378 = scmp.eq.s32.totalorder %s38, 0
      %p379 = por %p377, %p378
      %s381 = sadd.s32 %s380, 1
      %p384 = scmp.eq.s32.totalorder %s32, 3
      %p385 = scmp.ne.s32.totalorder %s380, %s382
      %p386 = scmp.eq.s32.totalorder %s32, 0
      %p387 = por %p385, %p386
      %p388 = scmp.ne.s32.totalorder %s380, %s382
      %p389 = scmp.eq.s32.totalorder %s37, 3
      %p390 = por %p388, %p389
      %p391 = scmp.ne.s32.totalorder %s382, %s383
      %p392 = scmp.eq.s32.totalorder %s37, 0
      %p393 = por %p391, %p392
      %p394 = scmp.ne.s32.totalorder %s382, %s383
      %p395 = scmp.eq.s32.totalorder %s38, 3
      %p396 = por %p394, %p395
      %p398 = scmp.ne.s32.totalorder %s383, %s397
      %p399 = scmp.eq.s32.totalorder %s38, 0
      %p400 = por %p398, %p399
      %s402 = sadd.s32 %s401, 1
      %p405 = scmp.eq.s32.totalorder %s32, 3
      %p406 = scmp.ne.s32.totalorder %s401, %s403
      %p407 = scmp.eq.s32.totalorder %s32, 0
      %p408 = por %p406, %p407
      %p409 = scmp.ne.s32.totalorder %s401, %s403
      %p410 = scmp.eq.s32.totalorder %s37, 3
      %p411 = por %p409, %p410
      %p412 = scmp.ne.s32.totalorder %s403, %s404
      %p413 = scmp.eq.s32.totalorder %s37, 0
      %p414 = por %p412, %p413
      %p415 = scmp.ne.s32.totalorder %s403, %s404
      %p416 = scmp.eq.s32.totalorder %s38, 3
      %p417 = por %p415, %p416
      %p419 = scmp.ne.s32.totalorder %s404, %s418
      %p420 = scmp.eq.s32.totalorder %s38, 0
      %p421 = por %p419, %p420
      %s423 = sadd.s32 %s422, 1
      %p426 = scmp.eq.s32.totalorder %s32, 3
      %p427 = scmp.ne.s32.totalorder %s422, %s424
      %p428 = scmp.eq.s32.totalorder %s32, 0
      %p429 = por %p427, %p428
      %p430 = scmp.ne.s32.totalorder %s422, %s424
      %p431 = scmp.eq.s32.totalorder %s37, 3
      %p432 = por %p430, %p431
      %p433 = scmp.ne.s32.totalorder %s424, %s425
      %p434 = scmp.eq.s32.totalorder %s37, 0
      %p435 = por %p433, %p434
      %p436 = scmp.ne.s32.totalorder %s424, %s425
      %p437 = scmp.eq.s32.totalorder %s38, 3
      %p438 = por %p436, %p437
      %p440 = scmp.ne.s32.totalorder %s425, %s439
      %p441 = scmp.eq.s32.totalorder %s38, 0
      %p442 = por %p440, %p441
      %s444 = sadd.s32 %s443, 1
      %p447 = scmp.eq.s32.totalorder %s32, 3
      %p448 = scmp.ne.s32.totalorder %s443, %s445
      %p449 = scmp.eq.s32.totalorder %s32, 0
      %p450 = por %p448, %p449
      %p451 = scmp.ne.s32.totalorder %s443, %s445
      %p452 = scmp.eq.s32.totalorder %s37, 3
      %p453 = por %p451, %p452
      %p454 = scmp.ne.s32.totalorder %s445, %s446
      %p455 = scmp.eq.s32.totalorder %s37, 0
      %p456 = por %p454, %p455
      %p457 = scmp.ne.s32.totalorder %s445, %s446
      %p458 = scmp.eq.s32.totalorder %s38, 3
      %p459 = por %p457, %p458
      %p461 = scmp.ne.s32.totalorder %s446, %s460
      %p462 = scmp.eq.s32.totalorder %s38, 0
      %p463 = por %p461, %p462
      %s464 = ssub.s32 %s39, %s51
      %p465 = scmp.eq.s32.totalorder %s464, 0
      %s467 = sadd.s32 %s466, 1
      %s468 = scalar_select %p465, %s466, %s467
      %p471 = pneg %p465
      %p472 = scmp.eq.s32.totalorder %s32, 3
      %p473 = por %p471, %p472
      %p474 = scmp.ne.s32.totalorder %s466, %s469
      %p475 = scmp.eq.s32.totalorder %s32, 0
      %p476 = por %p474, %p475
      %p477 = scmp.ne.s32.totalorder %s466, %s469
      %p478 = scmp.eq.s32.totalorder %s37, 3
      %p479 = por %p477, %p478
      %p480 = scmp.ne.s32.totalorder %s469, %s470
      %p481 = scmp.eq.s32.totalorder %s37, 0
      %p482 = por %p480, %p481
      %p483 = scmp.ne.s32.totalorder %s469, %s470
      %p484 = scmp.eq.s32.totalorder %s38, 3
      %p485 = por %p483, %p484
      %p487 = scmp.ne.s32.totalorder %s470, %s486
      %p488 = scmp.eq.s32.totalorder %s38, 0
      %p489 = por %p487, %p488
      %p490 = scmp.le.s32.totalorder 1, %s32
      %p491 = scmp.lt.s32.totalorder %s32, 5
      %p492 = pnand %p490, %p491
      %p493 = pneg %p492
      // Predicated region
      $region9: #{bert_classifier_forward.1} parent=5 // pred_check
        _
      $region10: #{bert_classifier_forward.1} parent=5 // pred_check_branch
        %495 = sbr.rel (%p492) target = $region12
      $region11: #{bert_classifier_forward.1} parent=5 // pred_region
        %s496 = ssub.s32 %s32, 1
        // Predicated region
        $region13: #{bert_classifier_forward.1} parent=11 // pred_check
          %p497 = pneg %p117
        $region14: #{bert_classifier_forward.1} parent=11 // pred_check_branch
          %499 = sbr.rel (%p497) target = $region16
        $region15: #{bert_classifier_forward.1} parent=11 // pred_region
          _
        $region16: #{bert_classifier_forward.1} parent=11 // pred_fallthru
          _
        // Predicated region
        $region17: #{bert_classifier_forward.1} parent=11 // pred_check
          %p500 = pneg %p138
        $region18: #{bert_classifier_forward.1} parent=11 // pred_check_branch
          %502 = sbr.rel (%p500) target = $region20
        $region19: #{bert_classifier_forward.1} parent=11 // pred_region
          _
        $region20: #{bert_classifier_forward.1} parent=11 // pred_fallthru
          _
        // Predicated region
        $region21: #{bert_classifier_forward.1} parent=11 // pred_check
          %p503 = pneg %p393
        $region22: #{bert_classifier_forward.1} parent=11 // pred_check_branch
          %505 = sbr.rel (%p503) target = $region24
        $region23: #{bert_classifier_forward.1} parent=11 // pred_region
          _
        $region24: #{bert_classifier_forward.1} parent=11 // pred_fallthru
          _
        // Predicated region
        $region25: #{bert_classifier_forward.1} parent=11 // pred_check
          %p506 = pneg %p414
        $region26: #{bert_classifier_forward.1} parent=11 // pred_check_branch
          %508 = sbr.rel (%p506) target = $region28
        $region27: #{bert_classifier_forward.1} parent=11 // pred_region
          _
        $region28: #{bert_classifier_forward.1} parent=11 // pred_fallthru
          _
        // Predicated region
        $region29: #{bert_classifier_forward.1} parent=11 // pred_check
          %p509 = pneg %p435
        $region30: #{bert_classifier_forward.1} parent=11 // pred_check_branch
          %511 = sbr.rel (%p509) target = $region32
        $region31: #{bert_classifier_forward.1} parent=11 // pred_region
          %s513 = ssub.s32 1024, 1024
          %514 = vsyncadd [#allocation7], %s513
          %s515 = sshll.u32 [#allocation8], 4
          %s516 = int_to_ptr.vmem [resolvable:$true] %s515
          %521 = dma.hbm_to_vmem [thread:$0]  %s15, 1024, %s516, [#allocation7], 64, 64, 4
        $region32: #{bert_classifier_forward.1} parent=11 // pred_fallthru
          _
        // Predicated region
        $region33: #{bert_classifier_forward.1} parent=11 // pred_check
          %p522 = pneg %p456
        $region34: #{bert_classifier_forward.1} parent=11 // pred_check_branch
          %524 = sbr.rel (%p522) target = $region36
        $region35: #{bert_classifier_forward.1} parent=11 // pred_region
          _
        $region36: #{bert_classifier_forward.1} parent=11 // pred_fallthru
          _
      $region12: #{bert_classifier_forward.1} parent=5 // pred_fallthru
        _
      %p525 = scmp.lt.s32.totalorder %s32, 4
      // Predicated region
      $region37: #{bert_classifier_forward.1} parent=5 // pred_check
        %p526 = pneg %p525
      $region38: #{bert_classifier_forward.1} parent=5 // pred_check_branch
        %528 = sbr.rel (%p526) target = $region40
      $region39: #{bert_classifier_forward.1} parent=5 // pred_region
        // Predicated region
        $region41: #{bert_classifier_forward.1} parent=39 // pred_check
          %p529 = pneg %p64
        $region42: #{bert_classifier_forward.1} parent=39 // pred_check_branch
          %531 = sbr.rel (%p529) target = $region44
        $region43: #{bert_classifier_forward.1} parent=39 // pred_region
          %p532 = scmp.lt.s32.totalorder %s39, 1
          %s533 = scalar_select %p532, %s39, 1
          %s534 = smul.addr %s533, 8
          %s535 = scalar_lea.vmem %s0, %s534
        $region44: #{bert_classifier_forward.1} parent=39 // pred_fallthru
          _
        // Predicated region
        $region45: #{bert_classifier_forward.1} parent=39 // pred_check
          %p536 = pneg %p90
        $region46: #{bert_classifier_forward.1} parent=39 // pred_check_branch
          %538 = sbr.rel (%p536) target = $region48
        $region47: #{bert_classifier_forward.1} parent=39 // pred_region
          %p539 = scmp.lt.s32.totalorder %s39, 1
          %s540 = scalar_select %p539, %s39, 1
          %s541 = smul.addr %s540, 8
          %s542 = scalar_lea.vmem %s1, %s541
        $region48: #{bert_classifier_forward.1} parent=39 // pred_fallthru
          _
        // Predicated region
        $region49: #{bert_classifier_forward.1} parent=39 // pred_check
          %p543 = pneg %p158
        $region50: #{bert_classifier_forward.1} parent=39 // pred_check_branch
          %545 = sbr.rel (%p543) target = $region52
        $region51: #{bert_classifier_forward.1} parent=39 // pred_region
          %p546 = scmp.lt.s32.totalorder %s39, 1
          %s547 = scalar_select %p546, %s39, 1
          %s548 = scalar_lea.vmem %s4, %s547
        $region52: #{bert_classifier_forward.1} parent=39 // pred_fallthru
          _
        // Predicated region
        $region53: #{bert_classifier_forward.1} parent=39 // pred_check
          %p549 = pneg %p184
        $region54: #{bert_classifier_forward.1} parent=39 // pred_check_branch
          %551 = sbr.rel (%p549) target = $region56
        $region55: #{bert_classifier_forward.1} parent=39 // pred_region
          %s552 = sand.u32 %s174, 1
          %s553 = scalar_lea.sflag [#allocation4], %s552
          %s554 = sand.u32 %s174, 1
          %s555 = smul.addr %s554, 192
          %s556 = scalar_lea.vmem [#allocation3], %s555
          %s558 = ssub.s32 3072, 3072
          %559 = vsyncadd %s553, %s558
          %s560 = smul.addr %s40, 48
          %s561 = smul.addr %s560, 64
          %s562 = scalar_lea.hbm %s5, %s561
          %s563 = sshll.u32 %s556, 4
          %s564 = int_to_ptr.vmem [resolvable:$true] %s563
          %569 = dma.hbm_to_vmem [thread:$0]  %s562, 3072, %s564, %s553, 192, 192, 12
        $region56: #{bert_classifier_forward.1} parent=39 // pred_fallthru
          _
        // Predicated region
        $region57: #{bert_classifier_forward.1} parent=39 // pred_check
          %p570 = pneg %p210
        $region58: #{bert_classifier_forward.1} parent=39 // pred_check_branch
          %572 = sbr.rel (%p570) target = $region60
        $region59: #{bert_classifier_forward.1} parent=39 // pred_region
          %p573 = scmp.lt.s32.totalorder %s40, 1
          %s574 = scalar_select %p573, %s40, 1
          %s575 = smul.addr %s574, 3
          %s576 = scalar_lea.vmem %s6, %s575
        $region60: #{bert_classifier_forward.1} parent=39 // pred_fallthru
          _
        // Predicated region
        $region61: #{bert_classifier_forward.1} parent=39 // pred_check
          %p577 = pneg %p236
        $region62: #{bert_classifier_forward.1} parent=39 // pred_check_branch
          %579 = sbr.rel (%p577) target = $region64
        $region63: #{bert_classifier_forward.1} parent=39 // pred_region
          %p580 = scmp.lt.s32.totalorder %s40, 1
          %s581 = scalar_select %p580, %s40, 1
          %s582 = smul.addr %s581, 16
          %s583 = smul.addr %s582, 4
          %s584 = scalar_lea.vmem %s7, %s583
        $region64: #{bert_classifier_forward.1} parent=39 // pred_fallthru
          _
        // Predicated region
        $region65: #{bert_classifier_forward.1} parent=39 // pred_check
          %p585 = pneg %p262
        $region66: #{bert_classifier_forward.1} parent=39 // pred_check_branch
          %587 = sbr.rel (%p585) target = $region68
        $region67: #{bert_classifier_forward.1} parent=39 // pred_region
          %p588 = scmp.lt.s32.totalorder %s40, 1
          %s589 = scalar_select %p588, %s40, 1
          %s590 = smul.addr %s589, 4
          %s591 = scalar_lea.vmem %s8, %s590
        $region68: #{bert_classifier_forward.1} parent=39 // pred_fallthru
          _
        // Predicated region
        $region69: #{bert_classifier_forward.1} parent=39 // pred_check
          %p592 = pneg %p288
        $region70: #{bert_classifier_forward.1} parent=39 // pred_check_branch
          %594 = sbr.rel (%p592) target = $region72
        $region71: #{bert_classifier_forward.1} parent=39 // pred_region
          %p595 = scmp.lt.s32.totalorder %s40, 1
          %s596 = scalar_select %p595, %s40, 1
          %s597 = smul.addr %s596, 32
          %s598 = smul.addr %s597, 4
          %s599 = scalar_lea.vmem %s9, %s598
        $region72: #{bert_classifier_forward.1} parent=39 // pred_fallthru
          _
        // Predicated region
        $region73: #{bert_classifier_forward.1} parent=39 // pred_check
          %p600 = pneg %p314
        $region74: #{bert_classifier_forward.1} parent=39 // pred_check_branch
          %602 = sbr.rel (%p600) target = $region76
        $region75: #{bert_classifier_forward.1} parent=39 // pred_region
          %p603 = scmp.lt.s32.totalorder %s40, 1
          %s604 = scalar_select %p603, %s40, 1
          %s605 = smul.addr %s604, 2
          %s606 = scalar_lea.vmem %s10, %s605
        $region76: #{bert_classifier_forward.1} parent=39 // pred_fallthru
          _
        // Predicated region
        $region77: #{bert_classifier_forward.1} parent=39 // pred_check
          %p607 = pneg %p340
        $region78: #{bert_classifier_forward.1} parent=39 // pred_check_branch
          %609 = sbr.rel (%p607) target = $region80
        $region79: #{bert_classifier_forward.1} parent=39 // pred_region
          %s610 = sand.u32 %s32, 1
          %s611 = scalar_lea.sflag [#allocation7], %s610
          %s612 = sand.u32 %s330, 1
          %s613 = smul.addr %s612, 128
          %s614 = scalar_lea.vmem [#allocation6], %s613
          %s616 = ssub.s32 2048, 2048
          %617 = vsyncadd %s611, %s616
          %s618 = smul.addr %s40, 32
          %s619 = smul.addr %s618, 64
          %s620 = scalar_lea.hbm %s11, %s619
          %s621 = sshll.u32 %s614, 4
          %s622 = int_to_ptr.vmem [resolvable:$true] %s621
          %627 = dma.hbm_to_vmem [thread:$0]  %s620, 2048, %s622, %s611, 64, 64, 4
        $region80: #{bert_classifier_forward.1} parent=39 // pred_fallthru
          _
        // Predicated region
        $region81: #{bert_classifier_forward.1} parent=39 // pred_check
          %p628 = pneg %p366
        $region82: #{bert_classifier_forward.1} parent=39 // pred_check_branch
          %630 = sbr.rel (%p628) target = $region84
        $region83: #{bert_classifier_forward.1} parent=39 // pred_region
          %p631 = scmp.lt.s32.totalorder %s40, 1
          %s632 = scalar_select %p631, %s40, 1
          %s633 = smul.addr %s632, 4
          %s634 = scalar_lea.vmem %s12, %s633
        $region84: #{bert_classifier_forward.1} parent=39 // pred_fallthru
          _
      $region40: #{bert_classifier_forward.1} parent=5 // pred_fallthru
        _
      %p635 = scmp.le.s32.totalorder 1, %s32
      %p636 = scmp.lt.s32.totalorder %s32, 5
      %p637 = pnand %p635, %p636
      %p638 = pneg %p637
      // Predicated region
      $region85: #{bert_classifier_forward.1} parent=5 // pred_check
        _
      $region86: #{bert_classifier_forward.1} parent=5 // pred_check_branch
        %640 = sbr.rel (%p637) target = $region88
      $region87: #{bert_classifier_forward.1} parent=5 // pred_region
        %s641 = ssub.s32 %s32, 1
        %s642 = sand.u32 %s177, 1
        %s643 = scalar_lea.sflag [#allocation4], %s642
        %s644 = sand.u32 %s177, 1
        %s645 = smul.addr %s644, 192
        %s646 = scalar_lea.vmem [#allocation3], %s645
        // Predicated region
        $region89: #{bert_classifier_forward.1} parent=87 // pred_check
          %p647 = pneg %p190
        $region90: #{bert_classifier_forward.1} parent=87 // pred_check_branch
          %649 = sbr.rel (%p647) target = $region92
        $region91: #{bert_classifier_forward.1} parent=87 // pred_region
          %650 = dma.done %s643, 3072
        $region92: #{bert_classifier_forward.1} parent=87 // pred_fallthru
          _
        %s651 = sand.u32 %s37, 1
        %s652 = scalar_lea.sflag [#allocation7], %s651
        %s653 = sand.u32 %s333, 1
        %s654 = smul.addr %s653, 128
        %s655 = scalar_lea.vmem [#allocation6], %s654
        // Predicated region
        $region93: #{bert_classifier_forward.1} parent=87 // pred_check
          %p656 = pneg %p346
        $region94: #{bert_classifier_forward.1} parent=87 // pred_check_branch
          %658 = sbr.rel (%p656) target = $region96
        $region95: #{bert_classifier_forward.1} parent=87 // pred_region
          %659 = dma.done %s652, 2048
        $region96: #{bert_classifier_forward.1} parent=87 // pred_fallthru
          _
        // Predicated region
        $region97: #{bert_classifier_forward.1} parent=87 // pred_check
          %p660 = pneg %p435
        $region98: #{bert_classifier_forward.1} parent=87 // pred_check_branch
          %662 = sbr.rel (%p660) target = $region100
        $region99: #{bert_classifier_forward.1} parent=87 // pred_region
          %663 = dma.done [#allocation7], 1024
        $region100: #{bert_classifier_forward.1} parent=87 // pred_fallthru
          _
        %p664 = scmp.lt.s32.totalorder %s41, 1
        %s665 = scalar_select %p664, %s41, 1
        %s666 = smul.addr %s665, 8
        %s667 = scalar_lea.vmem %s0, %s666
        %p668 = pneg %p70
        %p669 = pneg %p67
        %p670 = scmp.lt.s32.totalorder %s41, 1
        %s671 = scalar_select %p670, %s41, 1
        %s672 = smul.addr %s671, 8
        %s673 = scalar_lea.vmem %s1, %s672
        %p674 = pneg %p96
        %p675 = pneg %p93
        %p676 = pneg %p117
        %p677 = pneg %p114
        %p678 = pneg %p138
        %p679 = pneg %p135
        %p680 = scmp.lt.s32.totalorder %s41, 1
        %s681 = scalar_select %p680, %s41, 1
        %s682 = scalar_lea.vmem %s4, %s681
        %p683 = pneg %p164
        %p684 = pneg %p161
        %s685 = sand.u32 %s177, 1
        %s686 = scalar_lea.sflag [#allocation4], %s685
        %s687 = sand.u32 %s177, 1
        %s688 = smul.addr %s687, 192
        %s689 = scalar_lea.vmem [#allocation3], %s688
        %p690 = pneg %p190
        %p691 = pneg %p187
        %p692 = scmp.lt.s32.totalorder %s42, 1
        %s693 = scalar_select %p692, %s42, 1
        %s694 = smul.addr %s693, 3
        %s695 = scalar_lea.vmem %s6, %s694
        %p696 = pneg %p216
        %p697 = pneg %p213
        %p698 = scmp.lt.s32.totalorder %s42, 1
        %s699 = scalar_select %p698, %s42, 1
        %s700 = smul.addr %s699, 16
        %s701 = smul.addr %s700, 4
        %s702 = scalar_lea.vmem %s7, %s701
        %p703 = pneg %p242
        %p704 = pneg %p239
        %p705 = scmp.lt.s32.totalorder %s42, 1
        %s706 = scalar_select %p705, %s42, 1
        %s707 = smul.addr %s706, 4
        %s708 = scalar_lea.vmem %s8, %s707
        %p709 = pneg %p268
        %p710 = pneg %p265
        %p711 = scmp.lt.s32.totalorder %s42, 1
        %s712 = scalar_select %p711, %s42, 1
        %s713 = smul.addr %s712, 32
        %s714 = smul.addr %s713, 4
        %s715 = scalar_lea.vmem %s9, %s714
        %p716 = pneg %p294
        %p717 = pneg %p291
        %p718 = scmp.lt.s32.totalorder %s42, 1
        %s719 = scalar_select %p718, %s42, 1
        %s720 = smul.addr %s719, 2
        %s721 = scalar_lea.vmem %s10, %s720
        %p722 = pneg %p320
        %p723 = pneg %p317
        %s724 = sand.u32 %s37, 1
        %s725 = scalar_lea.sflag [#allocation7], %s724
        %s726 = sand.u32 %s333, 1
        %s727 = smul.addr %s726, 128
        %s728 = scalar_lea.vmem [#allocation6], %s727
        %p729 = pneg %p346
        %p730 = pneg %p343
        %p731 = scmp.lt.s32.totalorder %s42, 1
        %s732 = scalar_select %p731, %s42, 1
        %s733 = smul.addr %s732, 4
        %s734 = scalar_lea.vmem %s12, %s733
        %p735 = pneg %p372
        %p736 = pneg %p369
        %p737 = pneg %p393
        %p738 = pneg %p390
        %p739 = pneg %p414
        %p740 = pneg %p411
        %p741 = pneg %p435
        %p742 = pneg %p432
        %p743 = pneg %p456
        %p744 = pneg %p453
        %p745 = pneg %p482
        %p746 = pneg %p479
        %s747 = sand.u32 %s469, 1
        %s748 = scalar_lea.sflag [#allocation5], %s747
        %s749 = sand.u32 %s469, 1
        %s750 = scalar_lea.vmem [#allocation9], %s749
        %p751 = scmp.lt.s32.totalorder %s41, 1
        %s752 = scalar_select %p751, %s41, 1
        %s753 = smul.addr %s752, 8
        %s754 = scalar_lea.vmem %s0, %s753
        %p755 = scmp.lt.s32.totalorder %s41, 1
        %s756 = scalar_select %p755, %s41, 1
        %s757 = smul.addr %s756, 8
        %s758 = scalar_lea.vmem %s1, %s757
        %p759 = scmp.lt.s32.totalorder %s41, 1
        %s760 = scalar_select %p759, %s41, 1
        %s761 = scalar_lea.vmem %s4, %s760
        %p762 = scmp.lt.s32.totalorder %s42, 1
        %s763 = scalar_select %p762, %s42, 1
        %s764 = smul.addr %s763, 3
        %s765 = scalar_lea.vmem %s6, %s764
        %p766 = scmp.lt.s32.totalorder %s42, 1
        %s767 = scalar_select %p766, %s42, 1
        %s768 = smul.addr %s767, 16
        %s769 = smul.addr %s768, 4
        %s770 = scalar_lea.vmem %s7, %s769
        %p771 = scmp.lt.s32.totalorder %s42, 1
        %s772 = scalar_select %p771, %s42, 1
        %s773 = smul.addr %s772, 4
        %s774 = scalar_lea.vmem %s8, %s773
        %p775 = scmp.lt.s32.totalorder %s42, 1
        %s776 = scalar_select %p775, %s42, 1
        %s777 = smul.addr %s776, 32
        %s778 = smul.addr %s777, 4
        %s779 = scalar_lea.vmem %s9, %s778
        %p780 = scmp.lt.s32.totalorder %s42, 1
        %s781 = scalar_select %p780, %s42, 1
        %s782 = smul.addr %s781, 2
        %s783 = scalar_lea.vmem %s10, %s782
        %p784 = scmp.lt.s32.totalorder %s42, 1
        %s785 = scalar_select %p784, %s42, 1
        %s786 = smul.addr %s785, 4
        %s787 = scalar_lea.vmem %s12, %s786
        %p789 = scmp.eq.s32.totalorder %s42, 0
        // Predicated region
        $region101: #{bert_classifier_forward.1} parent=87 // pred_check
          %p790 = pneg %p789
        $region102: #{bert_classifier_forward.1} parent=87 // pred_check_branch
          %792 = sbr.rel (%p790) target = $region104
        $region103: #{bert_classifier_forward.1} parent=87 // pred_region
          %v793 = vld [vmem:[%s754] sm:$0xff]
          %v794 = vld [vmem:[%s2] sm:$0xff]
          %v795 = vadd.f32 %v793, %v794
          %v796 = vld [vmem:[%s758] sm:$0xff]
          %v797 = vadd.f32 %v795, %v796
          %v798 = vld [vmem:[%s3] sm:$0x1]
          %v799 = vld [vmem:[%s3 + $0x1] sm:$0x1]
          %800 = vadd.xlane.f32.xlu0 %v797
          %v801 = vpop.xlane.xlu0 %800
          %v802 = vrcp.pop 128.0
          %v803 = vmul.f32 %v801, %v802
          %v804 = vsub.f32 %v797, %v803
          %v805 = vmul.f32 %v804, %v804
          %806 = vadd.xlane.f32.xlu0 %v805
          %v807 = vpop.xlane.xlu0 %806
          %v808 = vmul.f32 %v807, %v802
          %v809 = vadd.f32 %v808, 1e-12
          %v810 = vrsqrt.pop %v809
          %v811 = vmul.f32 %v804, %v810
          %v812 = vlaneseq
          %v813 = vshrl.u32 %v812, 7
          %v814 = vsub.s32 0, %v813
          %v815 = vrot.slane %v798, %v814
          %v816 = vmul.f32 %v811, %v815
          %v817 = vlaneseq
          %v818 = vshrl.u32 %v817, 7
          %v819 = vsub.s32 0, %v818
          %v820 = vrot.slane %v799, %v819
          %v821 = vadd.f32 %v816, %v820
          %822 = vst [vmem:[#allocation2] sm:$0xff] %v821
        $region104: #{bert_classifier_forward.1} parent=87 // pred_fallthru
          _
        %v823 = vld [vmem:[#allocation2] sm:$0xff]
        %v824 = vpack.c.bf16 %v823, %v823
        %v825 = vld [vmem:[%s646] sm:$0xff]
        %v826 = vld [vmem:[%s646 + $0x8] sm:$0xf]
        %v827 = vld [vmem:[%s646 + $0xc] sm:$0xff]
        %v828 = vld [vmem:[%s646 + $0x14] sm:$0xf]
        %v829 = vld [vmem:[%s646 + $0x18] sm:$0xff]
        %v830 = vld [vmem:[%s646 + $0x20] sm:$0xf]
        %v831 = vld [vmem:[%s646 + $0x24] sm:$0xff]
        %v832 = vld [vmem:[%s646 + $0x2c] sm:$0xf]
        %v833 = vld [vmem:[%s646 + $0x30] sm:$0xff]
        %v834 = vld [vmem:[%s646 + $0x38] sm:$0xf]
        %v835 = vld [vmem:[%s646 + $0x3c] sm:$0xff]
        %v836 = vld [vmem:[%s646 + $0x44] sm:$0xf]
        %v837 = vld [vmem:[%s646 + $0x48] sm:$0xff]
        %v838 = vld [vmem:[%s646 + $0x50] sm:$0xf]
        %v839 = vld [vmem:[%s646 + $0x54] sm:$0xff]
        %v840 = vld [vmem:[%s646 + $0x5c] sm:$0xf]
        %v841 = vld [vmem:[%s646 + $0x60] sm:$0xff]
        %v842 = vld [vmem:[%s646 + $0x68] sm:$0xf]
        %v843 = vld [vmem:[%s646 + $0x6c] sm:$0xff]
        %v844 = vld [vmem:[%s646 + $0x74] sm:$0xf]
        %v845 = vld [vmem:[%s646 + $0x78] sm:$0xff]
        %v846 = vld [vmem:[%s646 + $0x80] sm:$0xf]
        %v847 = vld [vmem:[%s646 + $0x84] sm:$0xff]
        %v848 = vld [vmem:[%s646 + $0x8c] sm:$0xf]
        %v849 = vld [vmem:[%s646 + $0x90] sm:$0xff]
        %v850 = vld [vmem:[%s646 + $0x98] sm:$0xf]
        %v851 = vld [vmem:[%s646 + $0x9c] sm:$0xff]
        %v852 = vld [vmem:[%s646 + $0xa4] sm:$0xf]
        %v853 = vld [vmem:[%s646 + $0xa8] sm:$0xff]
        %v854 = vld [vmem:[%s646 + $0xb0] sm:$0xf]
        %v855 = vld [vmem:[%s646 + $0xb4] sm:$0xff]
        %v856 = vld [vmem:[%s646 + $0xbc] sm:$0xf]
        %v857 = vld [vmem:[%s765] sm:$0x7]
        %v859 = vlaneseq
        %v860 = vshrl.u32 %v859, 7
        %v861 = vsub.s32 0, %v860
        %v862 = vrot.slane %v857, %v861
        %v863 = vlaneseq
        %v864 = vshrl.u32 %v863, 7
        %v865 = vsub.s32 1, %v864
        %v866 = vrot.slane %v857, %v865
        %v867 = vlaneseq
        %v868 = vshrl.u32 %v867, 7
        %v869 = vsub.s32 2, %v868
        %v870 = vrot.slane %v857, %v869
        %v906 = vunpack.c.l.b16 %v825
        %v907 = vunpack.c.h.b16 %v825
        %v908 = vunpack.c.l.b16 %v826
        %v909 = vunpack.c.l.b16 %v827
        %v910 = vunpack.c.h.b16 %v827
        %v911 = vunpack.c.l.b16 %v828
        %v912 = vunpack.c.l.b16 %v829
        %v913 = vunpack.c.h.b16 %v829
        %v914 = vunpack.c.l.b16 %v830
        %v915 = vunpack.c.l.b16 %v831
        %v916 = vunpack.c.h.b16 %v831
        %v917 = vunpack.c.l.b16 %v832
        %v918 = vunpack.c.l.b16 %v833
        %v919 = vunpack.c.h.b16 %v833
        %v920 = vunpack.c.l.b16 %v834
        %v921 = vunpack.c.l.b16 %v835
        %v922 = vunpack.c.h.b16 %v835
        %v923 = vunpack.c.l.b16 %v836
        %v924 = vunpack.c.l.b16 %v837
        %v925 = vunpack.c.h.b16 %v837
        %v926 = vunpack.c.l.b16 %v838
        %v927 = vunpack.c.l.b16 %v839
        %v928 = vunpack.c.h.b16 %v839
        %v929 = vunpack.c.l.b16 %v840
        %v930 = vunpack.c.l.b16 %v841
        %v931 = vunpack.c.h.b16 %v841
        %v932 = vunpack.c.l.b16 %v842
        %v933 = vunpack.c.l.b16 %v843
        %v934 = vunpack.c.h.b16 %v843
        %v935 = vunpack.c.l.b16 %v844
        %v936 = vunpack.c.l.b16 %v845
        %v937 = vunpack.c.h.b16 %v845
        %v938 = vunpack.c.l.b16 %v846
        %v939 = vunpack.c.l.b16 %v847
        %v940 = vunpack.c.h.b16 %v847
        %v941 = vunpack.c.l.b16 %v848
        %v942 = vunpack.c.l.b16 %v849
        %v943 = vunpack.c.h.b16 %v849
        %v944 = vunpack.c.l.b16 %v850
        %v945 = vunpack.c.l.b16 %v851
        %v946 = vunpack.c.h.b16 %v851
        %v947 = vunpack.c.l.b16 %v852
        %v948 = vunpack.c.l.b16 %v853
        %v949 = vunpack.c.h.b16 %v853
        %v950 = vunpack.c.l.b16 %v854
        %v951 = vunpack.c.l.b16 %v855
        %v952 = vunpack.c.h.b16 %v855
        %v953 = vunpack.c.l.b16 %v856
        %v954 = vpack.c.b16 %v909, %v906
        %v955 = vpack.c.b16 %v910, %v907
        %v956 = vpack.c.b16 %v911, %v908
        %v957 = vpack.c.b16 %v915, %v912
        %v958 = vpack.c.b16 %v916, %v913
        %v959 = vpack.c.b16 %v917, %v914
        %v960 = vpack.c.b16 %v921, %v918
        %v961 = vpack.c.b16 %v922, %v919
        %v962 = vpack.c.b16 %v923, %v920
        %v963 = vpack.c.b16 %v927, %v924
        %v964 = vpack.c.b16 %v928, %v925
        %v965 = vpack.c.b16 %v929, %v926
        %v966 = vpack.c.b16 %v933, %v930
        %v967 = vpack.c.b16 %v934, %v931
        %v968 = vpack.c.b16 %v935, %v932
        %v969 = vpack.c.b16 %v939, %v936
        %v970 = vpack.c.b16 %v940, %v937
        %v971 = vpack.c.b16 %v941, %v938
        %v972 = vpack.c.b16 %v945, %v942
        %v973 = vpack.c.b16 %v946, %v943
        %v974 = vpack.c.b16 %v947, %v944
        %v975 = vpack.c.b16 %v951, %v948
        %v976 = vpack.c.b16 %v952, %v949
        %v977 = vpack.c.b16 %v953, %v950
        %1002 = vmatprep.subr.bf16.mxu0 %v955
        %1003 = vmatpush1.bf16.msra.mxu0 %v954
        %1004 = vmatprep.subr.bf16.mxu0 %v958
        %1005 = vmatpush1.bf16.msra.mxu0 %v957
        %1006 = vmatprep.subr.bf16.mxu0 %v961
        %1007 = vmatpush1.bf16.msra.mxu0 %v960
        %1008 = vmatprep.subr.bf16.mxu0 %v964
        %1009 = vmatpush1.bf16.msra.mxu0 %v963
        %1010 = vmatprep.subr.bf16.mxu0 %v967
        %1011 = vmatpush1.bf16.msra.mxu0 %v966
        %1012 = vmatprep.subr.bf16.mxu0 %v970
        %1013 = vmatpush1.bf16.msra.mxu0 %v969
        %1014 = vmatprep.subr.bf16.mxu0 %v973
        %1015 = vmatpush1.bf16.msra.mxu0 %v972
        %1016 = vmatprep.subr.bf16.mxu0 %v976
        %1017 = vmatpush1.bf16.msra.mxu0 %v975
        %1018 = vmatprep.subr.bf16.mxu0 0
        %1019 = vmatpush1.bf16.msra.mxu0 0
        %1020 = vmatprep.subr.bf16.mxu0 0
        %1021 = vmatpush1.bf16.msra.mxu0 0
        %1022 = vmatprep.subr.bf16.mxu0 0
        %1023 = vmatpush1.bf16.msra.mxu0 0
        %1024 = vmatprep.subr.bf16.mxu0 0
        %1025 = vmatpush1.bf16.msra.mxu0 0
        %1026 = vmatprep.subr.bf16.mxu0 0
        %1027 = vmatpush1.bf16.msra.mxu0 0
        %1028 = vmatprep.subr.bf16.mxu0 0
        %1029 = vmatpush1.bf16.msra.mxu0 0
        %1030 = vmatprep.subr.bf16.mxu0 0
        %1031 = vmatpush1.bf16.msra.mxu0 0
        %1032 = vmatprep.subr.bf16.mxu0 0
        %1033 = vmatpush1.bf16.msra.mxu0 0
        %1034 = vmatprep.mubr.bf16.mxu0 0
        %1035 = vmatmul.mubr.bf16.gmra.mrb[0].mxu0 %v824
        %v1036 = vpop.f32.mrb[0].mxu0
        %v1037 = vadd.f32 %v862, %v1036
        %v1038 = vpop.f32.mrb[0].mxu0
        %v1039 = vadd.f32 %v866, %v1038
        %v1040 = vpop.f32.mrb[0].mxu0
        %v1041 = vpop.f32.mrb[0].mxu0
        %1042 = vdwg.mxu0
        %1043 = vmatprep.subr.bf16.mxu0 0
        %1044 = vmatpush1.bf16.msra.mxu0 %v956
        %1045 = vmatprep.subr.bf16.mxu0 0
        %1046 = vmatpush1.bf16.msra.mxu0 %v959
        %1047 = vmatprep.subr.bf16.mxu0 0
        %1048 = vmatpush1.bf16.msra.mxu0 %v962
        %1049 = vmatprep.subr.bf16.mxu0 0
        %1050 = vmatpush1.bf16.msra.mxu0 %v965
        %1051 = vmatprep.subr.bf16.mxu0 0
        %1052 = vmatpush1.bf16.msra.mxu0 %v968
        %1053 = vmatprep.subr.bf16.mxu0 0
        %1054 = vmatpush1.bf16.msra.mxu0 %v971
        %1055 = vmatprep.subr.bf16.mxu0 0
        %1056 = vmatpush1.bf16.msra.mxu0 %v974
        %1057 = vmatprep.subr.bf16.mxu0 0
        %1058 = vmatpush1.bf16.msra.mxu0 %v977
        %1059 = vmatprep.subr.bf16.mxu0 0
        %1060 = vmatpush1.bf16.msra.mxu0 0
        %1061 = vmatprep.subr.bf16.mxu0 0
        %1062 = vmatpush1.bf16.msra.mxu0 0
        %1063 = vmatprep.subr.bf16.mxu0 0
        %1064 = vmatpush1.bf16.msra.mxu0 0
        %1065 = vmatprep.subr.bf16.mxu0 0
        %1066 = vmatpush1.bf16.msra.mxu0 0
        %1067 = vmatprep.subr.bf16.mxu0 0
        %1068 = vmatpush1.bf16.msra.mxu0 0
        %1069 = vmatprep.subr.bf16.mxu0 0
        %1070 = vmatpush1.bf16.msra.mxu0 0
        %1071 = vmatprep.subr.bf16.mxu0 0
        %1072 = vmatpush1.bf16.msra.mxu0 0
        %1073 = vmatprep.subr.bf16.mxu0 0
        %1074 = vmatpush1.bf16.msra.mxu0 0
        %1075 = vmatprep.mubr.bf16.mxu0 0
        %1076 = vmatmul.mubr.bf16.gmra.mrb[0].mxu0 %v824
        %v1077 = vpop.f32.mrb[0].mxu0
        %v1078 = vadd.f32 %v870, %v1077
        %v1079 = vpop.f32.mrb[0].mxu0
        %v1080 = vpop.f32.mrb[0].mxu0
        %v1081 = vpop.f32.mrb[0].mxu0
        %1082 = vdwg.mxu0
        %v1083 = vpack.c.bf16 %v1037, %v1037
        %v1084 = vpack.c.bf16 %v1039, %v1039
        %v1085 = vpack.c.bf16 %v1078, %v1078
        %v1086 = vld [vmem:[%s761] sm:$0x1]
        %v1087 = vld [vmem:[%s774] sm:$0x7]
        %v1088 = vlaneseq
        %v1089 = vshrl.u32 %v1088, 7
        %v1090 = vsub.s32 0, %v1089
        %v1091 = vrot.slane %v1087, %v1090
        %v1092 = vadd.f32 %v823, %v1091
        %vm1093 = vcmask 523264
        %v1095 = vsel %vm1093, %v1083, 0
        %v1098 = vsel %vm1093, %v1084, 0
        %1100 = vmatprep.subr.bf16.mxu0 0
        %1101 = vmatpush1.bf16.xpose.msra.mxu0 %v1098
        %1102 = vmatprep.subr.bf16.mxu0 0
        %1103 = vmatpush1.bf16.xpose.msra.mxu0 0
        %1104 = vmatprep.subr.bf16.mxu0 0
        %1105 = vmatpush1.bf16.xpose.msra.mxu0 0
        %1106 = vmatprep.subr.bf16.mxu0 0
        %1107 = vmatpush1.bf16.xpose.msra.mxu0 0
        %1108 = vmatprep.subr.bf16.mxu0 0
        %1109 = vmatpush1.bf16.xpose.msra.mxu0 0
        %1110 = vmatprep.subr.bf16.mxu0 0
        %1111 = vmatpush1.bf16.xpose.msra.mxu0 0
        %1112 = vmatprep.subr.bf16.mxu0 0
        %1113 = vmatpush1.bf16.xpose.msra.mxu0 0
        %1114 = vmatprep.subr.bf16.mxu0 0
        %1115 = vmatpush1.bf16.xpose.msra.mxu0 0
        %1116 = vmatprep.subr.bf16.mxu0 0
        %1117 = vmatpush1.bf16.xpose.msra.mxu0 0
        %1118 = vmatprep.subr.bf16.mxu0 0
        %1119 = vmatpush1.bf16.xpose.msra.mxu0 0
        %1120 = vmatprep.subr.bf16.mxu0 0
        %1121 = vmatpush1.bf16.xpose.msra.mxu0 0
        %1122 = vmatprep.subr.bf16.mxu0 0
        %1123 = vmatpush1.bf16.xpose.msra.mxu0 0
        %1124 = vmatprep.subr.bf16.mxu0 0
        %1125 = vmatpush1.bf16.xpose.msra.mxu0 0
        %1126 = vmatprep.subr.bf16.mxu0 0
        %1127 = vmatpush1.bf16.xpose.msra.mxu0 0
        %1128 = vmatprep.subr.bf16.mxu0 0
        %1129 = vmatpush1.bf16.xpose.msra.mxu0 0
        %1130 = vmatprep.subr.bf16.mxu0 0
        %1131 = vmatpush1.bf16.xpose.msra.mxu0 0
        %1132 = vmatprep.mubr.bf16.mxu0 0
        %1133 = vmatmul.mubr.bf16.gmra.mrb[0].mxu0 %v1095
        %v1134 = vpop.f32.mrb[0].mxu0
        %v1135 = vadd.f32 0.0, %v1134
        %v1136 = vpop.f32.mrb[0].mxu0
        %v1137 = vpop.f32.mrb[0].mxu0
        %v1138 = vpop.f32.mrb[0].mxu0
        %1139 = vdwg.mxu0
        %v1140 = vmul.f32 %v1135, 0.125
        %v1142 = vlaneseq
        %v1143 = vshrl.u32 %v1142, 7
        %v1144 = vsub.s32 0, %v1143
        %v1145 = vrot.slane %v1086, %v1144
        %v1147 = vadd.f32 %v1140, %v1145
        %vm1148 = vcmask 64512
        %v1149 = vsel %vm1148, %v1147, -inf
        %1150 = vmax.xlane.f32.xlu0 %v1149
        %v1151 = vpop.xlane.xlu0 %1150
        %v1152 = vsub.f32 %v1147, %v1151
        %v1153 = vmul.f32 %v1152, 1.442695
        %v1154 = vpow.pop %v1153
        %v1155 = vsel %vm1148, %v1154, 0.0
        %1156 = vadd.xlane.f32.xlu0 %v1155
        %v1157 = vpop.xlane.xlu0 %1156
        %v1158 = vrcp.pop %v1157
        %v1159 = vmul.f32 %v1154, %v1158
        %v1160 = vpack.c.bf16 %v1159, %v1159
        %v1162 = vsel %vm1148, %v1160, 0
        %vm1164 = vcmask 1043456
        %v1166 = vsel %vm1164, %v1085, 0
        %1168 = vmatprep.subr.bf16.mxu0 0
        %1169 = vmatpush1.bf16.msra.mxu0 %v1166
        %1170 = vmatprep.subr.bf16.mxu0 0
        %1171 = vmatpush1.bf16.msra.mxu0 0
        %1172 = vmatprep.subr.bf16.mxu0 0
        %1173 = vmatpush1.bf16.msra.mxu0 0
        %1174 = vmatprep.subr.bf16.mxu0 0
        %1175 = vmatpush1.bf16.msra.mxu0 0
        %1176 = vmatprep.subr.bf16.mxu0 0
        %1177 = vmatpush1.bf16.msra.mxu0 0
        %1178 = vmatprep.subr.bf16.mxu0 0
        %1179 = vmatpush1.bf16.msra.mxu0 0
        %1180 = vmatprep.subr.bf16.mxu0 0
        %1181 = vmatpush1.bf16.msra.mxu0 0
        %1182 = vmatprep.subr.bf16.mxu0 0
        %1183 = vmatpush1.bf16.msra.mxu0 0
        %1184 = vmatprep.subr.bf16.mxu0 0
        %1185 = vmatpush1.bf16.msra.mxu0 0
        %1186 = vmatprep.subr.bf16.mxu0 0
        %1187 = vmatpush1.bf16.msra.mxu0 0
        %1188 = vmatprep.subr.bf16.mxu0 0
        %1189 = vmatpush1.bf16.msra.mxu0 0
        %1190 = vmatprep.subr.bf16.mxu0 0
        %1191 = vmatpush1.bf16.msra.mxu0 0
        %1192 = vmatprep.subr.bf16.mxu0 0
        %1193 = vmatpush1.bf16.msra.mxu0 0
        %1194 = vmatprep.subr.bf16.mxu0 0
        %1195 = vmatpush1.bf16.msra.mxu0 0
        %1196 = vmatprep.subr.bf16.mxu0 0
        %1197 = vmatpush1.bf16.msra.mxu0 0
        %1198 = vmatprep.subr.bf16.mxu0 0
        %1199 = vmatpush1.bf16.msra.mxu0 0
        %1200 = vmatprep.mubr.bf16.mxu0 0
        %1201 = vmatmul.mubr.bf16.gmra.mrb[0].mxu0 %v1162
        %v1202 = vpop.f32.mrb[0].mxu0
        %v1203 = vadd.f32 0.0, %v1202
        %v1204 = vpop.f32.mrb[0].mxu0
        %v1205 = vpop.f32.mrb[0].mxu0
        %v1206 = vpop.f32.mrb[0].mxu0
        %1207 = vdwg.mxu0
        %v1208 = vpack.c.bf16 %v1203, %v1203
        %v1209 = vld [vmem:[%s770] sm:$0xf]
        %v1210 = vld [vmem:[%s770 + $0x4] sm:$0xf]
        %v1211 = vld [vmem:[%s770 + $0x8] sm:$0xf]
        %v1212 = vld [vmem:[%s770 + $0xc] sm:$0xf]
        %v1213 = vld [vmem:[%s770 + $0x10] sm:$0xf]
        %v1214 = vld [vmem:[%s770 + $0x14] sm:$0xf]
        %v1215 = vld [vmem:[%s770 + $0x18] sm:$0xf]
        %v1216 = vld [vmem:[%s770 + $0x1c] sm:$0xf]
        %v1225 = vunpack.c.l.b16 %v1209
        %v1226 = vunpack.c.l.b16 %v1210
        %v1227 = vunpack.c.l.b16 %v1211
        %v1228 = vunpack.c.l.b16 %v1212
        %v1229 = vunpack.c.l.b16 %v1213
        %v1230 = vunpack.c.l.b16 %v1214
        %v1231 = vunpack.c.l.b16 %v1215
        %v1232 = vunpack.c.l.b16 %v1216
        %v1233 = vpack.c.b16 %v1226, %v1225
        %v1234 = vpack.c.b16 %v1228, %v1227
        %v1235 = vpack.c.b16 %v1230, %v1229
        %v1236 = vpack.c.b16 %v1232, %v1231
        %v1242 = vsel %vm1093, %v1208, 0
        %1244 = vmatprep.subr.bf16.mxu0 0
        %1245 = vmatpush1.bf16.msra.mxu0 %v1233
        %1246 = vmatprep.subr.bf16.mxu0 0
        %1247 = vmatpush1.bf16.msra.mxu0 %v1234
        %1248 = vmatprep.subr.bf16.mxu0 0
        %1249 = vmatpush1.bf16.msra.mxu0 %v1235
        %1250 = vmatprep.subr.bf16.mxu0 0
        %1251 = vmatpush1.bf16.msra.mxu0 %v1236
        %1252 = vmatprep.subr.bf16.mxu0 0
        %1253 = vmatpush1.bf16.msra.mxu0 0
        %1254 = vmatprep.subr.bf16.mxu0 0
        %1255 = vmatpush1.bf16.msra.mxu0 0
        %1256 = vmatprep.subr.bf16.mxu0 0
        %1257 = vmatpush1.bf16.msra.mxu0 0
        %1258 = vmatprep.subr.bf16.mxu0 0
        %1259 = vmatpush1.bf16.msra.mxu0 0
        %1260 = vmatprep.subr.bf16.mxu0 0
        %1261 = vmatpush1.bf16.msra.mxu0 0
        %1262 = vmatprep.subr.bf16.mxu0 0
        %1263 = vmatpush1.bf16.msra.mxu0 0
        %1264 = vmatprep.subr.bf16.mxu0 0
        %1265 = vmatpush1.bf16.msra.mxu0 0
        %1266 = vmatprep.subr.bf16.mxu0 0
        %1267 = vmatpush1.bf16.msra.mxu0 0
        %1268 = vmatprep.subr.bf16.mxu0 0
        %1269 = vmatpush1.bf16.msra.mxu0 0
        %1270 = vmatprep.subr.bf16.mxu0 0
        %1271 = vmatpush1.bf16.msra.mxu0 0
        %1272 = vmatprep.subr.bf16.mxu0 0
        %1273 = vmatpush1.bf16.msra.mxu0 0
        %1274 = vmatprep.subr.bf16.mxu0 0
        %1275 = vmatpush1.bf16.msra.mxu0 0
        %1276 = vmatprep.mubr.bf16.mxu0 0
        %1277 = vmatmul.mubr.bf16.gmra.mrb[0].mxu0 %v1242
        %v1278 = vpop.f32.mrb[0].mxu0
        %v1279 = vadd.f32 0.0, %v1278
        %v1280 = vpop.f32.mrb[0].mxu0
        %v1281 = vpop.f32.mrb[0].mxu0
        %v1282 = vpop.f32.mrb[0].mxu0
        %1283 = vdwg.mxu0
        %v1284 = vadd.f32 %v1092, %v1279
        %1286 = vrot.lane.b32.xlu0 %v1083, 64
        %v1287 = vpop.permute.xlu0 %1286
        %1289 = vrot.lane.b32.xlu0 %v1084, 64
        %v1290 = vpop.permute.xlu0 %1289
        %v1292 = vsel %vm1093, %v1287, 0
        %v1295 = vsel %vm1093, %v1290, 0
        %1297 = vmatprep.subr.bf16.mxu0 0
        %1298 = vmatpush1.bf16.xpose.msra.mxu0 %v1295
        %1299 = vmatprep.subr.bf16.mxu0 0
        %1300 = vmatpush1.bf16.xpose.msra.mxu0 0
        %1301 = vmatprep.subr.bf16.mxu0 0
        %1302 = vmatpush1.bf16.xpose.msra.mxu0 0
        %1303 = vmatprep.subr.bf16.mxu0 0
        %1304 = vmatpush1.bf16.xpose.msra.mxu0 0
        %1305 = vmatprep.subr.bf16.mxu0 0
        %1306 = vmatpush1.bf16.xpose.msra.mxu0 0
        %1307 = vmatprep.subr.bf16.mxu0 0
        %1308 = vmatpush1.bf16.xpose.msra.mxu0 0
        %1309 = vmatprep.subr.bf16.mxu0 0
        %1310 = vmatpush1.bf16.xpose.msra.mxu0 0
        %1311 = vmatprep.subr.bf16.mxu0 0
        %1312 = vmatpush1.bf16.xpose.msra.mxu0 0
        %1313 = vmatprep.subr.bf16.mxu0 0
        %1314 = vmatpush1.bf16.xpose.msra.mxu0 0
        %1315 = vmatprep.subr.bf16.mxu0 0
        %1316 = vmatpush1.bf16.xpose.msra.mxu0 0
        %1317 = vmatprep.subr.bf16.mxu0 0
        %1318 = vmatpush1.bf16.xpose.msra.mxu0 0
        %1319 = vmatprep.subr.bf16.mxu0 0
        %1320 = vmatpush1.bf16.xpose.msra.mxu0 0
        %1321 = vmatprep.subr.bf16.mxu0 0
        %1322 = vmatpush1.bf16.xpose.msra.mxu0 0
        %1323 = vmatprep.subr.bf16.mxu0 0
        %1324 = vmatpush1.bf16.xpose.msra.mxu0 0
        %1325 = vmatprep.subr.bf16.mxu0 0
        %1326 = vmatpush1.bf16.xpose.msra.mxu0 0
        %1327 = vmatprep.subr.bf16.mxu0 0
        %1328 = vmatpush1.bf16.xpose.msra.mxu0 0
        %1329 = vmatprep.mubr.bf16.mxu0 0
        %1330 = vmatmul.mubr.bf16.gmra.mrb[0].mxu0 %v1292
        %v1331 = vpop.f32.mrb[0].mxu0
        %v1332 = vadd.f32 0.0, %v1331
        %v1333 = vpop.f32.mrb[0].mxu0
        %v1334 = vpop.f32.mrb[0].mxu0
        %v1335 = vpop.f32.mrb[0].mxu0
        %1336 = vdwg.mxu0
        %v1337 = vmul.f32 %v1332, 0.125
        %v1338 = vadd.f32 %v1337, %v1145
        %v1339 = vsel %vm1148, %v1338, -inf
        %1340 = vmax.xlane.f32.xlu0 %v1339
        %v1341 = vpop.xlane.xlu0 %1340
        %v1342 = vsub.f32 %v1338, %v1341
        %v1343 = vmul.f32 %v1342, 1.442695
        %v1344 = vpow.pop %v1343
        %v1345 = vsel %vm1148, %v1344, 0.0
        %1346 = vadd.xlane.f32.xlu0 %v1345
        %v1347 = vpop.xlane.xlu0 %1346
        %v1348 = vrcp.pop %v1347
        %v1349 = vmul.f32 %v1344, %v1348
        %v1350 = vpack.c.bf16 %v1349, %v1349
        %1352 = vrot.lane.b32.xlu0 %v1085, 64
        %v1353 = vpop.permute.xlu0 %1352
        %v1355 = vsel %vm1148, %v1350, 0
        %v1358 = vsel %vm1164, %v1353, 0
        %1360 = vmatprep.subr.bf16.mxu0 0
        %1361 = vmatpush1.bf16.msra.mxu0 %v1358
        %1362 = vmatprep.subr.bf16.mxu0 0
        %1363 = vmatpush1.bf16.msra.mxu0 0
        %1364 = vmatprep.subr.bf16.mxu0 0
        %1365 = vmatpush1.bf16.msra.mxu0 0
        %1366 = vmatprep.subr.bf16.mxu0 0
        %1367 = vmatpush1.bf16.msra.mxu0 0
        %1368 = vmatprep.subr.bf16.mxu0 0
        %1369 = vmatpush1.bf16.msra.mxu0 0
        %1370 = vmatprep.subr.bf16.mxu0 0
        %1371 = vmatpush1.bf16.msra.mxu0 0
        %1372 = vmatprep.subr.bf16.mxu0 0
        %1373 = vmatpush1.bf16.msra.mxu0 0
        %1374 = vmatprep.subr.bf16.mxu0 0
        %1375 = vmatpush1.bf16.msra.mxu0 0
        %1376 = vmatprep.subr.bf16.mxu0 0
        %1377 = vmatpush1.bf16.msra.mxu0 0
        %1378 = vmatprep.subr.bf16.mxu0 0
        %1379 = vmatpush1.bf16.msra.mxu0 0
        %1380 = vmatprep.subr.bf16.mxu0 0
        %1381 = vmatpush1.bf16.msra.mxu0 0
        %1382 = vmatprep.subr.bf16.mxu0 0
        %1383 = vmatpush1.bf16.msra.mxu0 0
        %1384 = vmatprep.subr.bf16.mxu0 0
        %1385 = vmatpush1.bf16.msra.mxu0 0
        %1386 = vmatprep.subr.bf16.mxu0 0
        %1387 = vmatpush1.bf16.msra.mxu0 0
        %1388 = vmatprep.subr.bf16.mxu0 0
        %1389 = vmatpush1.bf16.msra.mxu0 0
        %1390 = vmatprep.subr.bf16.mxu0 0
        %1391 = vmatpush1.bf16.msra.mxu0 0
        %1392 = vmatprep.mubr.bf16.mxu0 0
        %1393 = vmatmul.mubr.bf16.gmra.mrb[0].mxu0 %v1355
        %v1394 = vpop.f32.mrb[0].mxu0
        %v1395 = vadd.f32 0.0, %v1394
        %v1396 = vpop.f32.mrb[0].mxu0
        %v1397 = vpop.f32.mrb[0].mxu0
        %v1398 = vpop.f32.mrb[0].mxu0
        %1399 = vdwg.mxu0
        %v1400 = vpack.c.bf16 %v1395, %v1395
        %v1401 = vld [vmem:[%s770 + $0x20] sm:$0xf]
        %v1402 = vld [vmem:[%s770 + $0x24] sm:$0xf]
        %v1403 = vld [vmem:[%s770 + $0x28] sm:$0xf]
        %v1404 = vld [vmem:[%s770 + $0x2c] sm:$0xf]
        %v1405 = vld [vmem:[%s770 + $0x30] sm:$0xf]
        %v1406 = vld [vmem:[%s770 + $0x34] sm:$0xf]
        %v1407 = vld [vmem:[%s770 + $0x38] sm:$0xf]
        %v1408 = vld [vmem:[%s770 + $0x3c] sm:$0xf]
        %v1417 = vunpack.c.l.b16 %v1401
        %v1418 = vunpack.c.l.b16 %v1402
        %v1419 = vunpack.c.l.b16 %v1403
        %v1420 = vunpack.c.l.b16 %v1404
        %v1421 = vunpack.c.l.b16 %v1405
        %v1422 = vunpack.c.l.b16 %v1406
        %v1423 = vunpack.c.l.b16 %v1407
        %v1424 = vunpack.c.l.b16 %v1408
        %v1425 = vpack.c.b16 %v1418, %v1417
        %v1426 = vpack.c.b16 %v1420, %v1419
        %v1427 = vpack.c.b16 %v1422, %v1421
        %v1428 = vpack.c.b16 %v1424, %v1423
        %v1434 = vsel %vm1093, %v1400, 0
        %1436 = vmatprep.subr.bf16.mxu0 0
        %1437 = vmatpush1.bf16.msra.mxu0 %v1425
        %1438 = vmatprep.subr.bf16.mxu0 0
        %1439 = vmatpush1.bf16.msra.mxu0 %v1426
        %1440 = vmatprep.subr.bf16.mxu0 0
        %1441 = vmatpush1.bf16.msra.mxu0 %v1427
        %1442 = vmatprep.subr.bf16.mxu0 0
        %1443 = vmatpush1.bf16.msra.mxu0 %v1428
        %1444 = vmatprep.subr.bf16.mxu0 0
        %1445 = vmatpush1.bf16.msra.mxu0 0
        %1446 = vmatprep.subr.bf16.mxu0 0
        %1447 = vmatpush1.bf16.msra.mxu0 0
        %1448 = vmatprep.subr.bf16.mxu0 0
        %1449 = vmatpush1.bf16.msra.mxu0 0
        %1450 = vmatprep.subr.bf16.mxu0 0
        %1451 = vmatpush1.bf16.msra.mxu0 0
        %1452 = vmatprep.subr.bf16.mxu0 0
        %1453 = vmatpush1.bf16.msra.mxu0 0
        %1454 = vmatprep.subr.bf16.mxu0 0
        %1455 = vmatpush1.bf16.msra.mxu0 0
        %1456 = vmatprep.subr.bf16.mxu0 0
        %1457 = vmatpush1.bf16.msra.mxu0 0
        %1458 = vmatprep.subr.bf16.mxu0 0
        %1459 = vmatpush1.bf16.msra.mxu0 0
        %1460 = vmatprep.subr.bf16.mxu0 0
        %1461 = vmatpush1.bf16.msra.mxu0 0
        %1462 = vmatprep.subr.bf16.mxu0 0
        %1463 = vmatpush1.bf16.msra.mxu0 0
        %1464 = vmatprep.subr.bf16.mxu0 0
        %1465 = vmatpush1.bf16.msra.mxu0 0
        %1466 = vmatprep.subr.bf16.mxu0 0
        %1467 = vmatpush1.bf16.msra.mxu0 0
        %1468 = vmatprep.mubr.bf16.mxu0 0
        %1469 = vmatmul.mubr.bf16.gmra.mrb[0].mxu0 %v1434
        %v1470 = vpop.f32.mrb[0].mxu0
        %v1471 = vadd.f32 0.0, %v1470
        %v1472 = vpop.f32.mrb[0].mxu0
        %v1473 = vpop.f32.mrb[0].mxu0
        %v1474 = vpop.f32.mrb[0].mxu0
        %1475 = vdwg.mxu0
        %v1476 = vadd.f32 %v1284, %v1471
        %1477 = vadd.xlane.f32.xlu0 %v1476
        %v1478 = vpop.xlane.xlu0 %1477
        %v1479 = vrcp.pop 128.0
        %v1480 = vmul.f32 %v1478, %v1479
        %v1481 = vsub.f32 %v1476, %v1480
        %v1482 = vmul.f32 %v1481, %v1481
        %1483 = vadd.xlane.f32.xlu0 %v1482
        %v1484 = vpop.xlane.xlu0 %1483
        %v1485 = vmul.f32 %v1484, %v1479
        %v1486 = vadd.f32 %v1485, 1e-12
        %v1487 = vrsqrt.pop %v1486
        %v1488 = vmul.f32 %v1481, %v1487
        %v1489 = vlaneseq
        %v1490 = vshrl.u32 %v1489, 7
        %v1491 = vsub.s32 1, %v1490
        %v1492 = vrot.slane %v1087, %v1491
        %v1493 = vmul.f32 %v1488, %v1492
        %v1494 = vlaneseq
        %v1495 = vshrl.u32 %v1494, 7
        %v1496 = vsub.s32 2, %v1495
        %v1497 = vrot.slane %v1087, %v1496
        %v1498 = vadd.f32 %v1493, %v1497
        %v1499 = vpack.c.bf16 %v1498, %v1498
        %v1500 = vld [vmem:[%s779] sm:$0xff]
        %v1501 = vld [vmem:[%s779 + $0x8] sm:$0xff]
        %v1502 = vld [vmem:[%s779 + $0x10] sm:$0xff]
        %v1503 = vld [vmem:[%s779 + $0x18] sm:$0xff]
        %v1504 = vld [vmem:[%s779 + $0x20] sm:$0xff]
        %v1505 = vld [vmem:[%s779 + $0x28] sm:$0xff]
        %v1506 = vld [vmem:[%s779 + $0x30] sm:$0xff]
        %v1507 = vld [vmem:[%s779 + $0x38] sm:$0xff]
        %v1508 = vld [vmem:[%s779 + $0x40] sm:$0xff]
        %v1509 = vld [vmem:[%s779 + $0x48] sm:$0xff]
        %v1510 = vld [vmem:[%s779 + $0x50] sm:$0xff]
        %v1511 = vld [vmem:[%s779 + $0x58] sm:$0xff]
        %v1512 = vld [vmem:[%s779 + $0x60] sm:$0xff]
        %v1513 = vld [vmem:[%s779 + $0x68] sm:$0xff]
        %v1514 = vld [vmem:[%s779 + $0x70] sm:$0xff]
        %v1515 = vld [vmem:[%s779 + $0x78] sm:$0xff]
        %v1516 = vld [vmem:[%s783] sm:$0x3]
        %v1518 = vlaneseq
        %v1519 = vshrl.u32 %v1518, 7
        %v1520 = vsub.s32 0, %v1519
        %v1521 = vrot.slane %v1516, %v1520
        %v1522 = vlaneseq
        %v1523 = vshrl.u32 %v1522, 7
        %v1524 = vsub.s32 1, %v1523
        %v1525 = vrot.slane %v1516, %v1524
        %v1544 = vunpack.c.l.b16 %v1500
        %v1545 = vunpack.c.h.b16 %v1500
        %v1546 = vunpack.c.l.b16 %v1501
        %v1547 = vunpack.c.h.b16 %v1501
        %v1548 = vunpack.c.l.b16 %v1502
        %v1549 = vunpack.c.h.b16 %v1502
        %v1550 = vunpack.c.l.b16 %v1503
        %v1551 = vunpack.c.h.b16 %v1503
        %v1552 = vunpack.c.l.b16 %v1504
        %v1553 = vunpack.c.h.b16 %v1504
        %v1554 = vunpack.c.l.b16 %v1505
        %v1555 = vunpack.c.h.b16 %v1505
        %v1556 = vunpack.c.l.b16 %v1506
        %v1557 = vunpack.c.h.b16 %v1506
        %v1558 = vunpack.c.l.b16 %v1507
        %v1559 = vunpack.c.h.b16 %v1507
        %v1560 = vunpack.c.l.b16 %v1508
        %v1561 = vunpack.c.h.b16 %v1508
        %v1562 = vunpack.c.l.b16 %v1509
        %v1563 = vunpack.c.h.b16 %v1509
        %v1564 = vunpack.c.l.b16 %v1510
        %v1565 = vunpack.c.h.b16 %v1510
        %v1566 = vunpack.c.l.b16 %v1511
        %v1567 = vunpack.c.h.b16 %v1511
        %v1568 = vunpack.c.l.b16 %v1512
        %v1569 = vunpack.c.h.b16 %v1512
        %v1570 = vunpack.c.l.b16 %v1513
        %v1571 = vunpack.c.h.b16 %v1513
        %v1572 = vunpack.c.l.b16 %v1514
        %v1573 = vunpack.c.h.b16 %v1514
        %v1574 = vunpack.c.l.b16 %v1515
        %v1575 = vunpack.c.h.b16 %v1515
        %v1576 = vpack.c.b16 %v1546, %v1544
        %v1577 = vpack.c.b16 %v1547, %v1545
        %v1578 = vpack.c.b16 %v1550, %v1548
        %v1579 = vpack.c.b16 %v1551, %v1549
        %v1580 = vpack.c.b16 %v1554, %v1552
        %v1581 = vpack.c.b16 %v1555, %v1553
        %v1582 = vpack.c.b16 %v1558, %v1556
        %v1583 = vpack.c.b16 %v1559, %v1557
        %v1584 = vpack.c.b16 %v1562, %v1560
        %v1585 = vpack.c.b16 %v1563, %v1561
        %v1586 = vpack.c.b16 %v1566, %v1564
        %v1587 = vpack.c.b16 %v1567, %v1565
        %v1588 = vpack.c.b16 %v1570, %v1568
        %v1589 = vpack.c.b16 %v1571, %v1569
        %v1590 = vpack.c.b16 %v1574, %v1572
        %v1591 = vpack.c.b16 %v1575, %v1573
        %1608 = vmatprep.subr.bf16.mxu0 %v1577
        %1609 = vmatpush1.bf16.msra.mxu0 %v1576
        %1610 = vmatprep.subr.bf16.mxu0 %v1579
        %1611 = vmatpush1.bf16.msra.mxu0 %v1578
        %1612 = vmatprep.subr.bf16.mxu0 %v1581
        %1613 = vmatpush1.bf16.msra.mxu0 %v1580
        %1614 = vmatprep.subr.bf16.mxu0 %v1583
        %1615 = vmatpush1.bf16.msra.mxu0 %v1582
        %1616 = vmatprep.subr.bf16.mxu0 %v1585
        %1617 = vmatpush1.bf16.msra.mxu0 %v1584
        %1618 = vmatprep.subr.bf16.mxu0 %v1587
        %1619 = vmatpush1.bf16.msra.mxu0 %v1586
        %1620 = vmatprep.subr.bf16.mxu0 %v1589
        %1621 = vmatpush1.bf16.msra.mxu0 %v1588
        %1622 = vmatprep.subr.bf16.mxu0 %v1591
        %1623 = vmatpush1.bf16.msra.mxu0 %v1590
        %1624 = vmatprep.subr.bf16.mxu0 0
        %1625 = vmatpush1.bf16.msra.mxu0 0
        %1626 = vmatprep.subr.bf16.mxu0 0
        %1627 = vmatpush1.bf16.msra.mxu0 0
        %1628 = vmatprep.subr.bf16.mxu0 0
        %1629 = vmatpush1.bf16.msra.mxu0 0
        %1630 = vmatprep.subr.bf16.mxu0 0
        %1631 = vmatpush1.bf16.msra.mxu0 0
        %1632 = vmatprep.subr.bf16.mxu0 0
        %1633 = vmatpush1.bf16.msra.mxu0 0
        %1634 = vmatprep.subr.bf16.mxu0 0
        %1635 = vmatpush1.bf16.msra.mxu0 0
        %1636 = vmatprep.subr.bf16.mxu0 0
        %1637 = vmatpush1.bf16.msra.mxu0 0
        %1638 = vmatprep.subr.bf16.mxu0 0
        %1639 = vmatpush1.bf16.msra.mxu0 0
        %1640 = vmatprep.mubr.bf16.mxu0 0
        %1641 = vmatmul.mubr.bf16.gmra.mrb[0].mxu0 %v1499
        %v1642 = vpop.f32.mrb[0].mxu0
        %v1643 = vadd.f32 %v1521, %v1642
        %v1644 = vpop.f32.mrb[0].mxu0
        %v1645 = vadd.f32 %v1525, %v1644
        %v1646 = vpop.f32.mrb[0].mxu0
        %v1647 = vpop.f32.mrb[0].mxu0
        %1648 = vdwg.mxu0
        %v1649 = vmul.f32 %v1643, 0.5
        %v1650 = vmul.f32 %v1645, 0.5
        %v1651 = vmul.f32 %v1643, 0.044715
        %v1652 = vmul.f32 %v1645, 0.044715
        %v1653 = vmul.f32 %v1651, %v1643
        %v1654 = vmul.f32 %v1652, %v1645
        %v1655 = vmul.f32 %v1653, %v1643
        %v1656 = vmul.f32 %v1654, %v1645
        %v1657 = vadd.f32 %v1643, %v1655
        %v1658 = vadd.f32 %v1645, %v1656
        %v1659 = vmul.f32 %v1657, 0.7978846
        %v1660 = vmul.f32 %v1658, 0.7978846
        %v1661 = vtanh.pop %v1659
        %v1662 = vtanh.pop %v1660
        %v1663 = vadd.f32 %v1661, 1.0
        %v1664 = vadd.f32 %v1662, 1.0
        %v1665 = vmul.f32 %v1649, %v1663
        %v1666 = vmul.f32 %v1650, %v1664
        %v1667 = vld [vmem:[%s787] sm:$0x7]
        %v1668 = vpack.c.bf16 %v1665, %v1665
        %v1669 = vpack.c.bf16 %v1666, %v1666
        %v1670 = vld [vmem:[%s655] sm:$0xf]
        %v1671 = vld [vmem:[%s655 + $0x4] sm:$0xf]
        %v1672 = vld [vmem:[%s655 + $0x8] sm:$0xf]
        %v1673 = vld [vmem:[%s655 + $0xc] sm:$0xf]
        %v1674 = vld [vmem:[%s655 + $0x10] sm:$0xf]
        %v1675 = vld [vmem:[%s655 + $0x14] sm:$0xf]
        %v1676 = vld [vmem:[%s655 + $0x18] sm:$0xf]
        %v1677 = vld [vmem:[%s655 + $0x1c] sm:$0xf]
        %v1678 = vld [vmem:[%s655 + $0x20] sm:$0xf]
        %v1679 = vld [vmem:[%s655 + $0x24] sm:$0xf]
        %v1680 = vld [vmem:[%s655 + $0x28] sm:$0xf]
        %v1681 = vld [vmem:[%s655 + $0x2c] sm:$0xf]
        %v1682 = vld [vmem:[%s655 + $0x30] sm:$0xf]
        %v1683 = vld [vmem:[%s655 + $0x34] sm:$0xf]
        %v1684 = vld [vmem:[%s655 + $0x38] sm:$0xf]
        %v1685 = vld [vmem:[%s655 + $0x3c] sm:$0xf]
        %v1686 = vld [vmem:[%s655 + $0x40] sm:$0xf]
        %v1687 = vld [vmem:[%s655 + $0x44] sm:$0xf]
        %v1688 = vld [vmem:[%s655 + $0x48] sm:$0xf]
        %v1689 = vld [vmem:[%s655 + $0x4c] sm:$0xf]
        %v1690 = vld [vmem:[%s655 + $0x50] sm:$0xf]
        %v1691 = vld [vmem:[%s655 + $0x54] sm:$0xf]
        %v1692 = vld [vmem:[%s655 + $0x58] sm:$0xf]
        %v1693 = vld [vmem:[%s655 + $0x5c] sm:$0xf]
        %v1694 = vld [vmem:[%s655 + $0x60] sm:$0xf]
        %v1695 = vld [vmem:[%s655 + $0x64] sm:$0xf]
        %v1696 = vld [vmem:[%s655 + $0x68] sm:$0xf]
        %v1697 = vld [vmem:[%s655 + $0x6c] sm:$0xf]
        %v1698 = vld [vmem:[%s655 + $0x70] sm:$0xf]
        %v1699 = vld [vmem:[%s655 + $0x74] sm:$0xf]
        %v1700 = vld [vmem:[%s655 + $0x78] sm:$0xf]
        %v1701 = vld [vmem:[%s655 + $0x7c] sm:$0xf]
        %v1702 = vlaneseq
        %v1703 = vshrl.u32 %v1702, 7
        %v1704 = vsub.s32 0, %v1703
        %v1705 = vrot.slane %v1667, %v1704
        %v1738 = vunpack.c.l.b16 %v1670
        %v1739 = vunpack.c.l.b16 %v1671
        %v1740 = vunpack.c.l.b16 %v1672
        %v1741 = vunpack.c.l.b16 %v1673
        %v1742 = vunpack.c.l.b16 %v1674
        %v1743 = vunpack.c.l.b16 %v1675
        %v1744 = vunpack.c.l.b16 %v1676
        %v1745 = vunpack.c.l.b16 %v1677
        %v1746 = vunpack.c.l.b16 %v1678
        %v1747 = vunpack.c.l.b16 %v1679
        %v1748 = vunpack.c.l.b16 %v1680
        %v1749 = vunpack.c.l.b16 %v1681
        %v1750 = vunpack.c.l.b16 %v1682
        %v1751 = vunpack.c.l.b16 %v1683
        %v1752 = vunpack.c.l.b16 %v1684
        %v1753 = vunpack.c.l.b16 %v1685
        %v1754 = vunpack.c.l.b16 %v1686
        %v1755 = vunpack.c.l.b16 %v1687
        %v1756 = vunpack.c.l.b16 %v1688
        %v1757 = vunpack.c.l.b16 %v1689
        %v1758 = vunpack.c.l.b16 %v1690
        %v1759 = vunpack.c.l.b16 %v1691
        %v1760 = vunpack.c.l.b16 %v1692
        %v1761 = vunpack.c.l.b16 %v1693
        %v1762 = vunpack.c.l.b16 %v1694
        %v1763 = vunpack.c.l.b16 %v1695
        %v1764 = vunpack.c.l.b16 %v1696
        %v1765 = vunpack.c.l.b16 %v1697
        %v1766 = vunpack.c.l.b16 %v1698
        %v1767 = vunpack.c.l.b16 %v1699
        %v1768 = vunpack.c.l.b16 %v1700
        %v1769 = vunpack.c.l.b16 %v1701
        %v1770 = vpack.c.b16 %v1739, %v1738
        %v1771 = vpack.c.b16 %v1741, %v1740
        %v1772 = vpack.c.b16 %v1743, %v1742
        %v1773 = vpack.c.b16 %v1745, %v1744
        %v1774 = vpack.c.b16 %v1747, %v1746
        %v1775 = vpack.c.b16 %v1749, %v1748
        %v1776 = vpack.c.b16 %v1751, %v1750
        %v1777 = vpack.c.b16 %v1753, %v1752
        %v1778 = vpack.c.b16 %v1755, %v1754
        %v1779 = vpack.c.b16 %v1757, %v1756
        %v1780 = vpack.c.b16 %v1759, %v1758
        %v1781 = vpack.c.b16 %v1761, %v1760
        %v1782 = vpack.c.b16 %v1763, %v1762
        %v1783 = vpack.c.b16 %v1765, %v1764
        %v1784 = vpack.c.b16 %v1767, %v1766
        %v1785 = vpack.c.b16 %v1769, %v1768
        %1802 = vmatprep.subr.bf16.mxu0 0
        %1803 = vmatpush1.bf16.msra.mxu0 %v1770
        %1804 = vmatprep.subr.bf16.mxu0 0
        %1805 = vmatpush1.bf16.msra.mxu0 %v1771
        %1806 = vmatprep.subr.bf16.mxu0 0
        %1807 = vmatpush1.bf16.msra.mxu0 %v1772
        %1808 = vmatprep.subr.bf16.mxu0 0
        %1809 = vmatpush1.bf16.msra.mxu0 %v1773
        %1810 = vmatprep.subr.bf16.mxu0 0
        %1811 = vmatpush1.bf16.msra.mxu0 %v1774
        %1812 = vmatprep.subr.bf16.mxu0 0
        %1813 = vmatpush1.bf16.msra.mxu0 %v1775
        %1814 = vmatprep.subr.bf16.mxu0 0
        %1815 = vmatpush1.bf16.msra.mxu0 %v1776
        %1816 = vmatprep.subr.bf16.mxu0 0
        %1817 = vmatpush1.bf16.msra.mxu0 %v1777
        %1818 = vmatprep.subr.bf16.mxu0 0
        %1819 = vmatpush1.bf16.msra.mxu0 %v1778
        %1820 = vmatprep.subr.bf16.mxu0 0
        %1821 = vmatpush1.bf16.msra.mxu0 %v1779
        %1822 = vmatprep.subr.bf16.mxu0 0
        %1823 = vmatpush1.bf16.msra.mxu0 %v1780
        %1824 = vmatprep.subr.bf16.mxu0 0
        %1825 = vmatpush1.bf16.msra.mxu0 %v1781
        %1826 = vmatprep.subr.bf16.mxu0 0
        %1827 = vmatpush1.bf16.msra.mxu0 %v1782
        %1828 = vmatprep.subr.bf16.mxu0 0
        %1829 = vmatpush1.bf16.msra.mxu0 %v1783
        %1830 = vmatprep.subr.bf16.mxu0 0
        %1831 = vmatpush1.bf16.msra.mxu0 %v1784
        %1832 = vmatprep.subr.bf16.mxu0 0
        %1833 = vmatpush1.bf16.msra.mxu0 %v1785
        %1834 = vmatprep.mubr.bf16.mxu0 %v1669
        %1835 = vmatmul.mubr.bf16.gmra.mrb[0].mxu0 %v1668
        %v1836 = vpop.f32.mrb[0].mxu0
        %v1837 = vadd.f32 %v1705, %v1836
        %v1838 = vpop.f32.mrb[0].mxu0
        %v1839 = vpop.f32.mrb[0].mxu0
        %v1840 = vpop.f32.mrb[0].mxu0
        %1841 = vdwg.mxu0
        %v1842 = vadd.f32 %v1837, %v1498
        %1843 = vadd.xlane.f32.xlu0 %v1842
        %v1844 = vpop.xlane.xlu0 %1843
        %v1845 = vmul.f32 %v1844, %v1479
        %v1846 = vsub.f32 %v1842, %v1845
        %v1847 = vmul.f32 %v1846, %v1846
        %1848 = vadd.xlane.f32.xlu0 %v1847
        %v1849 = vpop.xlane.xlu0 %1848
        %v1850 = vmul.f32 %v1849, %v1479
        %v1851 = vadd.f32 %v1850, 1e-12
        %v1852 = vrsqrt.pop %v1851
        %v1853 = vmul.f32 %v1846, %v1852
        %v1854 = vlaneseq
        %v1855 = vshrl.u32 %v1854, 7
        %v1856 = vsub.s32 1, %v1855
        %v1857 = vrot.slane %v1667, %v1856
        %v1858 = vmul.f32 %v1853, %v1857
        %v1859 = vlaneseq
        %v1860 = vshrl.u32 %v1859, 7
        %v1861 = vsub.s32 2, %v1860
        %v1862 = vrot.slane %v1667, %v1861
        %v1863 = vadd.f32 %v1858, %v1862
        %1864 = vst [vmem:[#allocation2] sm:$0xff] %v1863
        %p1865 = scmp.eq.s32.totalorder %s42, 1
        // Predicated region
        $region105: #{bert_classifier_forward.1} parent=87 // pred_check
          %p1866 = pneg %p1865
        $region106: #{bert_classifier_forward.1} parent=87 // pred_check_branch
          %1868 = sbr.rel (%p1866) target = $region108
        $region107: #{bert_classifier_forward.1} parent=87 // pred_region
          %v1869 = vpack.c.bf16 %v1863, %v1863
          %v1870 = vld [vmem:[%s13] sm:$0xf]
          %v1871 = vld [vmem:[%s13 + $0x4] sm:$0xf]
          %v1872 = vld [vmem:[%s13 + $0x8] sm:$0xf]
          %v1873 = vld [vmem:[%s13 + $0xc] sm:$0xf]
          %v1874 = vld [vmem:[%s13 + $0x10] sm:$0xf]
          %v1875 = vld [vmem:[%s13 + $0x14] sm:$0xf]
          %v1876 = vld [vmem:[%s13 + $0x18] sm:$0xf]
          %v1877 = vld [vmem:[%s13 + $0x1c] sm:$0xf]
          %v1878 = vld [vmem:[%s13 + $0x20] sm:$0xf]
          %v1879 = vld [vmem:[%s13 + $0x24] sm:$0xf]
          %v1880 = vld [vmem:[%s13 + $0x28] sm:$0xf]
          %v1881 = vld [vmem:[%s13 + $0x2c] sm:$0xf]
          %v1882 = vld [vmem:[%s13 + $0x30] sm:$0xf]
          %v1883 = vld [vmem:[%s13 + $0x34] sm:$0xf]
          %v1884 = vld [vmem:[%s13 + $0x38] sm:$0xf]
          %v1885 = vld [vmem:[%s13 + $0x3c] sm:$0xf]
          %v1886 = vld [vmem:[%s14] sm:$0x1]
          %v1888 = vlaneseq
          %v1889 = vshrl.u32 %v1888, 7
          %v1890 = vsub.s32 0, %v1889
          %v1891 = vrot.slane %v1886, %v1890
          %v1909 = vunpack.c.l.b16 %v1870
          %v1910 = vunpack.c.l.b16 %v1871
          %v1911 = vunpack.c.l.b16 %v1872
          %v1912 = vunpack.c.l.b16 %v1873
          %v1913 = vunpack.c.l.b16 %v1874
          %v1914 = vunpack.c.l.b16 %v1875
          %v1915 = vunpack.c.l.b16 %v1876
          %v1916 = vunpack.c.l.b16 %v1877
          %v1917 = vunpack.c.l.b16 %v1878
          %v1918 = vunpack.c.l.b16 %v1879
          %v1919 = vunpack.c.l.b16 %v1880
          %v1920 = vunpack.c.l.b16 %v1881
          %v1921 = vunpack.c.l.b16 %v1882
          %v1922 = vunpack.c.l.b16 %v1883
          %v1923 = vunpack.c.l.b16 %v1884
          %v1924 = vunpack.c.l.b16 %v1885
          %v1925 = vpack.c.b16 %v1910, %v1909
          %v1926 = vpack.c.b16 %v1912, %v1911
          %v1927 = vpack.c.b16 %v1914, %v1913
          %v1928 = vpack.c.b16 %v1916, %v1915
          %v1929 = vpack.c.b16 %v1918, %v1917
          %v1930 = vpack.c.b16 %v1920, %v1919
          %v1931 = vpack.c.b16 %v1922, %v1921
          %v1932 = vpack.c.b16 %v1924, %v1923
          %1941 = vmatprep.subr.bf16.mxu0 0
          %1942 = vmatpush1.bf16.msra.mxu0 %v1925
          %1943 = vmatprep.subr.bf16.mxu0 0
          %1944 = vmatpush1.bf16.msra.mxu0 %v1926
          %1945 = vmatprep.subr.bf16.mxu0 0
          %1946 = vmatpush1.bf16.msra.mxu0 %v1927
          %1947 = vmatprep.subr.bf16.mxu0 0
          %1948 = vmatpush1.bf16.msra.mxu0 %v1928
          %1949 = vmatprep.subr.bf16.mxu0 0
          %1950 = vmatpush1.bf16.msra.mxu0 %v1929
          %1951 = vmatprep.subr.bf16.mxu0 0
          %1952 = vmatpush1.bf16.msra.mxu0 %v1930
          %1953 = vmatprep.subr.bf16.mxu0 0
          %1954 = vmatpush1.bf16.msra.mxu0 %v1931
          %1955 = vmatprep.subr.bf16.mxu0 0
          %1956 = vmatpush1.bf16.msra.mxu0 %v1932
          %1957 = vmatprep.subr.bf16.mxu0 0
          %1958 = vmatpush1.bf16.msra.mxu0 0
          %1959 = vmatprep.subr.bf16.mxu0 0
          %1960 = vmatpush1.bf16.msra.mxu0 0
          %1961 = vmatprep.subr.bf16.mxu0 0
          %1962 = vmatpush1.bf16.msra.mxu0 0
          %1963 = vmatprep.subr.bf16.mxu0 0
          %1964 = vmatpush1.bf16.msra.mxu0 0
          %1965 = vmatprep.subr.bf16.mxu0 0
          %1966 = vmatpush1.bf16.msra.mxu0 0
          %1967 = vmatprep.subr.bf16.mxu0 0
          %1968 = vmatpush1.bf16.msra.mxu0 0
          %1969 = vmatprep.subr.bf16.mxu0 0
          %1970 = vmatpush1.bf16.msra.mxu0 0
          %1971 = vmatprep.subr.bf16.mxu0 0
          %1972 = vmatpush1.bf16.msra.mxu0 0
          %1973 = vmatprep.mubr.bf16.mxu0 0
          %1974 = vmatmul.mubr.bf16.gmra.mrb[0].mxu0 %v1869
          %v1975 = vpop.f32.mrb[0].mxu0
          %v1976 = vadd.f32 %v1891, %v1975
          %v1977 = vpop.f32.mrb[0].mxu0
          %v1978 = vpop.f32.mrb[0].mxu0
          %v1979 = vpop.f32.mrb[0].mxu0
          %1980 = vdwg.mxu0
          %v1981 = vtanh.pop %v1976
          %v1982 = vpack.c.bf16 %v1981, %v1981
          %v1983 = vld [vmem:[#allocation8] sm:$0xf]
          %v1984 = vld [vmem:[#allocation8 + $0x4] sm:$0xf]
          %v1985 = vld [vmem:[#allocation8 + $0x8] sm:$0xf]
          %v1986 = vld [vmem:[#allocation8 + $0xc] sm:$0xf]
          %v1987 = vld [vmem:[#allocation8 + $0x10] sm:$0xf]
          %v1988 = vld [vmem:[#allocation8 + $0x14] sm:$0xf]
          %v1989 = vld [vmem:[#allocation8 + $0x18] sm:$0xf]
          %v1990 = vld [vmem:[#allocation8 + $0x1c] sm:$0xf]
          %v1991 = vld [vmem:[#allocation8 + $0x20] sm:$0xf]
          %v1992 = vld [vmem:[#allocation8 + $0x24] sm:$0xf]
          %v1993 = vld [vmem:[#allocation8 + $0x28] sm:$0xf]
          %v1994 = vld [vmem:[#allocation8 + $0x2c] sm:$0xf]
          %v1995 = vld [vmem:[#allocation8 + $0x30] sm:$0xf]
          %v1996 = vld [vmem:[#allocation8 + $0x34] sm:$0xf]
          %v1997 = vld [vmem:[#allocation8 + $0x38] sm:$0xf]
          %v1998 = vld [vmem:[#allocation8 + $0x3c] sm:$0xf]
          %v1999 = vld [vmem:[%s16] sm:$0x1]
          %v2001 = vlaneseq
          %v2002 = vshrl.u32 %v2001, 7
          %v2003 = vsub.s32 0, %v2002
          %v2004 = vrot.slane %v1999, %v2003
          %v2022 = vunpack.c.l.b16 %v1983
          %v2023 = vunpack.c.l.b16 %v1984
          %v2024 = vunpack.c.l.b16 %v1985
          %v2025 = vunpack.c.l.b16 %v1986
          %v2026 = vunpack.c.l.b16 %v1987
          %v2027 = vunpack.c.l.b16 %v1988
          %v2028 = vunpack.c.l.b16 %v1989
          %v2029 = vunpack.c.l.b16 %v1990
          %v2030 = vunpack.c.l.b16 %v1991
          %v2031 = vunpack.c.l.b16 %v1992
          %v2032 = vunpack.c.l.b16 %v1993
          %v2033 = vunpack.c.l.b16 %v1994
          %v2034 = vunpack.c.l.b16 %v1995
          %v2035 = vunpack.c.l.b16 %v1996
          %v2036 = vunpack.c.l.b16 %v1997
          %v2037 = vunpack.c.l.b16 %v1998
          %v2038 = vpack.c.b16 %v2023, %v2022
          %v2039 = vpack.c.b16 %v2025, %v2024
          %v2040 = vpack.c.b16 %v2027, %v2026
          %v2041 = vpack.c.b16 %v2029, %v2028
          %v2042 = vpack.c.b16 %v2031, %v2030
          %v2043 = vpack.c.b16 %v2033, %v2032
          %v2044 = vpack.c.b16 %v2035, %v2034
          %v2045 = vpack.c.b16 %v2037, %v2036
          %2054 = vmatprep.subr.bf16.mxu0 0
          %2055 = vmatpush1.bf16.msra.mxu0 %v2038
          %2056 = vmatprep.subr.bf16.mxu0 0
          %2057 = vmatpush1.bf16.msra.mxu0 %v2039
          %2058 = vmatprep.subr.bf16.mxu0 0
          %2059 = vmatpush1.bf16.msra.mxu0 %v2040
          %2060 = vmatprep.subr.bf16.mxu0 0
          %2061 = vmatpush1.bf16.msra.mxu0 %v2041
          %2062 = vmatprep.subr.bf16.mxu0 0
          %2063 = vmatpush1.bf16.msra.mxu0 %v2042
          %2064 = vmatprep.subr.bf16.mxu0 0
          %2065 = vmatpush1.bf16.msra.mxu0 %v2043
          %2066 = vmatprep.subr.bf16.mxu0 0
          %2067 = vmatpush1.bf16.msra.mxu0 %v2044
          %2068 = vmatprep.subr.bf16.mxu0 0
          %2069 = vmatpush1.bf16.msra.mxu0 %v2045
          %2070 = vmatprep.subr.bf16.mxu0 0
          %2071 = vmatpush1.bf16.msra.mxu0 0
          %2072 = vmatprep.subr.bf16.mxu0 0
          %2073 = vmatpush1.bf16.msra.mxu0 0
          %2074 = vmatprep.subr.bf16.mxu0 0
          %2075 = vmatpush1.bf16.msra.mxu0 0
          %2076 = vmatprep.subr.bf16.mxu0 0
          %2077 = vmatpush1.bf16.msra.mxu0 0
          %2078 = vmatprep.subr.bf16.mxu0 0
          %2079 = vmatpush1.bf16.msra.mxu0 0
          %2080 = vmatprep.subr.bf16.mxu0 0
          %2081 = vmatpush1.bf16.msra.mxu0 0
          %2082 = vmatprep.subr.bf16.mxu0 0
          %2083 = vmatpush1.bf16.msra.mxu0 0
          %2084 = vmatprep.subr.bf16.mxu0 0
          %2085 = vmatpush1.bf16.msra.mxu0 0
          %2086 = vmatprep.mubr.bf16.mxu0 0
          %2087 = vmatmul.mubr.bf16.gmra.mrb[0].mxu0 %v1982
          %v2088 = vpop.f32.mrb[0].mxu0
          %v2089 = vadd.f32 %v2004, %v2088
          %v2090 = vpop.f32.mrb[0].mxu0
          %v2091 = vpop.f32.mrb[0].mxu0
          %v2092 = vpop.f32.mrb[0].mxu0
          %2093 = vdwg.mxu0
          %vm2094 = vcmask 1040384
          %v2095 = vsel %vm2094, %v2089, -inf
          %2096 = vmax.xlane.f32.xlu0 %v2095
          %v2097 = vpop.xlane.xlu0 %2096
          %v2098 = vsub.f32 %v2089, %v2097
          %v2099 = vmul.f32 %v2098, 1.442695
          %v2100 = vpow.pop %v2099
          %v2101 = vsel %vm2094, %v2100, 0.0
          %2102 = vadd.xlane.f32.xlu0 %v2101
          %v2103 = vpop.xlane.xlu0 %2102
          %v2104 = vrcp.pop %v2103
          %v2105 = vmul.f32 %v2100, %v2104
          %2106 = vst [vmem:[%s750] sm:$0x1] %v2105
        $region108: #{bert_classifier_forward.1} parent=87 // pred_fallthru
          _
        %s2107 = sand.u32 %s469, 1
        %s2108 = scalar_lea.sflag [#allocation5], %s2107
        %s2109 = sand.u32 %s469, 1
        %s2110 = scalar_lea.vmem [#allocation9], %s2109
        // Predicated region
        $region109: #{bert_classifier_forward.1} parent=87 // pred_check
          %p2111 = pneg %p479
        $region110: #{bert_classifier_forward.1} parent=87 // pred_check_branch
          %2113 = sbr.rel (%p2111) target = $region112
        $region111: #{bert_classifier_forward.1} parent=87 // pred_region
          %s2115 = ssub.s32 16, 16
          %2116 = vsyncadd %s2108, %s2115
          %s2117 = smul.addr %s41, 16
          %s2118 = scalar_lea.hbm %s17, %s2117
          %s2120 = sshll.u32 %s2110, 4
          %s2121 = int_to_ptr.vmem [resolvable:$true] %s2120
          %2123 = dma.vmem_to_hbm [thread:$0]  %s2121, 16, %s2118, %s2108
        $region112: #{bert_classifier_forward.1} parent=87 // pred_fallthru
          _
      $region88: #{bert_classifier_forward.1} parent=5 // pred_fallthru
        _
      %p2124 = scmp.le.s32.totalorder 2, %s32
      // Predicated region
      $region113: #{bert_classifier_forward.1} parent=5 // pred_check
        %p2125 = pneg %p2124
      $region114: #{bert_classifier_forward.1} parent=5 // pred_check_branch
        %2127 = sbr.rel (%p2125) target = $region116
      $region115: #{bert_classifier_forward.1} parent=5 // pred_region
        %s2128 = ssub.s32 %s32, 2
        // Predicated region
        $region117: #{bert_classifier_forward.1} parent=115 // pred_check
          %p2129 = pneg %p485
        $region118: #{bert_classifier_forward.1} parent=115 // pred_check_branch
          %2131 = sbr.rel (%p2129) target = $region120
        $region119: #{bert_classifier_forward.1} parent=115 // pred_region
          %s2132 = sand.u32 %s470, 1
          %s2133 = scalar_lea.sflag [#allocation5], %s2132
          %s2134 = sand.u32 %s470, 1
          %s2135 = scalar_lea.vmem [#allocation9], %s2134
          %2136 = dma.done %s2133, 16
        $region120: #{bert_classifier_forward.1} parent=115 // pred_fallthru
          _
      $region116: #{bert_classifier_forward.1} parent=5 // pred_fallthru
        _
    $region6: #{bert_classifier_forward.1} parent=1 // loop_footer
      %s36 = sadd.s32 1, %s32
    $region7: #{bert_classifier_forward.1} parent=1 // loop_footer_branch
      %31 = sbr.rel target = $region3
    $region8: #{bert_classifier_forward.1} parent=1 // loop_exit
      _
    %2137 = vsyncpa [#allocation4], 1
    %s2138 = scalar_lea.sflag [#allocation4], 1
    %2139 = vsyncpa %s2138, 1
    %2140 = vsyncpa [#allocation7], 1
    %s2141 = scalar_lea.sflag [#allocation7], 1
    %2142 = vsyncpa %s2141, 1
    %2143 = vsyncpa [#allocation5], 1
    %s2144 = scalar_lea.sflag [#allocation5], 1
    %2145 = vsyncpa %s2144, 1

</llo_original>
